<compile_context>
chip_gen: v7x
topology: tpu7x:2x2x1
jax: 0.10.0
libtpu: 0.0.40
codegen_flags: <defaults>
</compile_context>

<pallas_src>
import jax
import jax.numpy as jnp
from jax.experimental import pallas as pl
from jax.experimental.pallas import tpu as pltpu

IN_FEATURES = 1000
OUT_FEATURES = 1000
N_PAD = 1024  # output dim padded to a multiple of 128 -> lane-dense stores


def linear_kernel(x_ref, w_ref, b_ref, o_ref):
    # x_ref: (B, 1000) f32    w_ref: (1000, 1024) bf16
    # b_ref: (1, 1024) f32    o_ref: (B, 1024)    f32
    x = x_ref[...].astype(jnp.bfloat16)  # in-kernel cast: no wrapper pad/cast HLO
    acc = jnp.dot(x, w_ref[...], preferred_element_type=jnp.float32)
    o_ref[...] = acc + b_ref[...]


def _linear_pallas_padded(x, w_t_bf16, b_pad):
    """Padded-output Linear forward: (B, 1000) f32 -> (B, 1024) f32."""
    B = x.shape[0]
    return pl.pallas_call(
        linear_kernel,
        out_shape=jax.ShapeDtypeStruct((B, N_PAD), jnp.float32),
        grid=(1,),  # single step: no grid-step overhead on single-TC chips
        in_specs=[
            pl.BlockSpec((B, IN_FEATURES), lambda i: (0, 0)),   # full activation
            pl.BlockSpec((IN_FEATURES, N_PAD), lambda i: (0, 0)),  # full weight
            pl.BlockSpec((1, N_PAD), lambda i: (0, 0)),         # bias
        ],
        out_specs=pl.BlockSpec((B, N_PAD), lambda i: (0, 0)),
        compiler_params=pltpu.CompilerParams(
            dimension_semantics=("arbitrary",),
        ),
        cost_estimate=pl.CostEstimate(
            flops=2 * B * IN_FEATURES * OUT_FEATURES,
            transcendentals=0,
            bytes_accessed=(
                4 * B * IN_FEATURES          # f32 activation in
                + 2 * IN_FEATURES * N_PAD    # bf16 weight (dominant stream)
                + 4 * N_PAD                  # f32 bias
                + 4 * B * N_PAD              # f32 output
            ),
        ),
    )(x, w_t_bf16, b_pad)


@jax.jit
def linear_pallas(x, w_t_bf16, b_pad):
    """y = x @ W^T + b  (nn.Linear(1000, 1000) forward), sliced to (B, 1000).

    Steady-state callers that can consume the padded (B, 1024) output should
    call _linear_pallas_padded directly and skip this slice.
    """
    y_pad = _linear_pallas_padded(x, w_t_bf16, b_pad)
    return y_pad[:, :OUT_FEATURES]


def init_params(key):
    """Deterministic init matching nn.Linear(1000, 1000).

    PyTorch default: U(-1/sqrt(fan_in), 1/sqrt(fan_in)) for weight & bias.
    weight: (out, in); the kernel consumes its transpose (in, out).
    """
    kw, kb = jax.random.split(key)
    bound = 1.0 / jnp.sqrt(jnp.float32(IN_FEATURES))
    weight = jax.random.uniform(
        kw, (OUT_FEATURES, IN_FEATURES), jnp.float32, -bound, bound
    )
    bias = jax.random.uniform(kb, (OUT_FEATURES,), jnp.float32, -bound, bound)
    return weight, bias


def prepare_params(weight, bias):
    """One-time: transpose weight, pad N to 1024, cast weight to bf16.

    K stays at 1000 (exact, no zero-row padding needed); padded output
    columns carry zero weight + zero bias and are sliced off by the wrapper.
    """
    w_t = weight.T  # (in, out) = (1000, 1000)
    w_t_bf16 = jnp.pad(w_t, ((0, 0), (0, N_PAD - OUT_FEATURES))).astype(jnp.bfloat16)
    b_pad = jnp.pad(bias, (0, N_PAD - OUT_FEATURES)).reshape(1, N_PAD)
    return w_t_bf16, b_pad


if __name__ == "__main__":
    key = jax.random.PRNGKey(0)
    k_x, k_p = jax.random.split(key)

    batch = 8  # multiple of 8 sublanes
    x = jax.random.normal(k_x, (batch, IN_FEATURES), jnp.float32)

    weight, bias = init_params(k_p)
    w_t_bf16, b_pad = prepare_params(weight, bias)

    y = linear_pallas(x, w_t_bf16, b_pad)
    y = jax.block_until_ready(y)

    # Reference: plain f32 Linear forward. bf16 matmul inputs give ~1e-2
    # relative error, so tolerances are loosened accordingly.
    y_ref = x @ weight.T + bias
    assert y.shape == (batch, OUT_FEATURES)
    assert jnp.allclose(y, y_ref, atol=5e-2, rtol=5e-2), (
        float(jnp.max(jnp.abs(y - y_ref)))
    )

    print("KERNEL_OK")
</pallas_src>

<mosaic_0001>
module attributes {stable_mosaic.version = 11 : i64} {
  func.func @linear_kernel(%arg0: i32, %arg1: memref<8x1000xf32, #tpu.memory_space<vmem>>, %arg2: memref<1000x1024xbf16, #tpu.memory_space<vmem>>, %arg3: memref<1x1024xf32, #tpu.memory_space<vmem>>, %arg4: memref<8x1024xf32, #tpu.memory_space<vmem>>) attributes {dimension_semantics = [#tpu.dimension_semantics<arbitrary>], iteration_bounds = array<i64: 1>, scalar_prefetch = 0 : i64, scratch_operands = 0 : i64, tpu.core_type = #tpu.core_type<tc>, window_params = [{pipeline_mode = #tpu.pipeline_mode<synchronous>, transform_indices = @transform_0, window_bounds = array<i64: 8, 1000>}, {pipeline_mode = #tpu.pipeline_mode<synchronous>, transform_indices = @transform_1, window_bounds = array<i64: 1000, 1024>}, {pipeline_mode = #tpu.pipeline_mode<synchronous>, transform_indices = @transform_2, window_bounds = array<i64: 1, 1024>}, {pipeline_mode = #tpu.pipeline_mode<synchronous>, transform_indices = @transform_3, window_bounds = array<i64: 8, 1024>}]} {
    %c0 = arith.constant 0 : index
    %c0_0 = arith.constant 0 : index
    %0 = vector.load %arg1[%c0, %c0_0] : memref<8x1000xf32, #tpu.memory_space<vmem>>, vector<8x1000xf32>
    %1 = arith.truncf %0 : vector<8x1000xf32> to vector<8x1000xbf16>
    %c0_1 = arith.constant 0 : index
    %c0_2 = arith.constant 0 : index
    %2 = vector.load %arg2[%c0_1, %c0_2] : memref<1000x1024xbf16, #tpu.memory_space<vmem>>, vector<1000x1024xbf16>
    %cst = arith.constant dense<0.000000e+00> : vector<8x1024xf32>
    %3 = tpu.matmul %1, %2, %cst {dimension_numbers = #tpu.dot_dimension_numbers<[1], [0], [0], [1], [0, 0, 1, 1], [], []>} : vector<8x1000xbf16>, vector<1000x1024xbf16>, vector<8x1024xf32> -> vector<8x1024xf32>
    %c0_3 = arith.constant 0 : index
    %c0_4 = arith.constant 0 : index
    %4 = vector.load %arg3[%c0_3, %c0_4] : memref<1x1024xf32, #tpu.memory_space<vmem>>, vector<1x1024xf32>
    %5 = vector.broadcast %4 : vector<1x1024xf32> to vector<8x1024xf32>
    %6 = arith.addf %3, %5 : vector<8x1024xf32>
    %c0_5 = arith.constant 0 : index
    %c0_6 = arith.constant 0 : index
    %7 = vector.load %arg4[%c0_5, %c0_6] : memref<8x1024xf32, #tpu.memory_space<vmem>>, vector<8x1024xf32>
    tpu.vector_store %arg4[%c0_5, %c0_6], %6 {strides = array<i32>} : memref<8x1024xf32, #tpu.memory_space<vmem>>, vector<8x1024xf32>,
    return
  }
  func.func @transform_0(%arg0: i32) -> (i32, i32) {
    %c0_i32 = arith.constant 0 : i32
    %c0_i32_0 = arith.constant 0 : i32
    %c0_i32_1 = arith.constant 0 : i32
    return %c0_i32, %c0_i32_0 : i32, i32
  }
  func.func @transform_1(%arg0: i32) -> (i32, i32) {
    %c0_i32 = arith.constant 0 : i32
    %c0_i32_0 = arith.constant 0 : i32
    %c0_i32_1 = arith.constant 0 : i32
    return %c0_i32, %c0_i32_0 : i32, i32
  }
  func.func @transform_2(%arg0: i32) -> (i32, i32) {
    %c0_i32 = arith.constant 0 : i32
    %c0_i32_0 = arith.constant 0 : i32
    %c0_i32_1 = arith.constant 0 : i32
    return %c0_i32, %c0_i32_0 : i32, i32
  }
  func.func @transform_3(%arg0: i32) -> (i32, i32) {
    %c0_i32 = arith.constant 0 : i32
    %c0_i32_0 = arith.constant 0 : i32
    %c0_i32_1 = arith.constant 0 : i32
    return %c0_i32, %c0_i32_0 : i32, i32
  }
}

</mosaic_0001>

<llo_original>
// kernel: linear_pallas.1
$region0: #{linear_pallas.1}
  #allocation0 [shape = 'u32[]', space=smem, size = 0x4, offset = 0x4, fixed_abs, tag = 'smem constant byte address 0x4 - core index']
  #allocation1 [shape = 'u32[144,128]{1,0:T(1,128)}', space=vmem, size = 0x12000, scoped, tag = 'internal scratch']
  %s0 = inlined_call_operand.hbm [shape: f32[8,1000], index: 0, kind: input, shape index: {}]
  %s1 = inlined_call_operand.hbm [shape: bf16[1000,1024], index: 1, kind: input, shape index: {}]
  %s2 = inlined_call_operand.hbm [shape: f32[1,1024], index: 2, kind: input, shape index: {}]
  %s3 = inlined_call_operand.hbm [shape: f32[8,1024], index: 3, kind: output, shape index: {}]
  %s4 = sld [smem:[#allocation0]]
  $region34: #{linear_pallas.1} parent=0
    _
  %s6 = ssub.s32 1, %s4
  %s7 = scalar_select 0, %s6, %s4
  $region1: #{linear_pallas.1} parent=0
    #allocation2 [shape = 'u8[32768]{0}', space=vmem, size = 0x8000, scoped, tag = 'input window, operand 0, single buffered']
    #allocation3 [shape = 's32[1]{0}', space=sflag, size = 0x4, scoped, tag = 'scoped memory for linear_pallas.1']
    #allocation4 [shape = 's32[1]{0}', space=sflag, size = 0x4, scoped, tag = 'scoped memory for linear_pallas.1']
    #allocation5 [shape = 'u8[2048000]{0}', space=vmem, size = 0x1f4000, scoped, tag = 'input window, operand 1, single buffered']
    #allocation6 [shape = 's32[1]{0}', space=sflag, size = 0x4, scoped, tag = 'scoped memory for linear_pallas.1']
    #allocation7 [shape = 'u8[4096]{0}', space=vmem, size = 0x1000, scoped, tag = 'input window, operand 2, single buffered']
    #allocation8 [shape = 'u8[32768]{0}', space=vmem, size = 0x8000, scoped, tag = 'output window, operand 0, single buffered']
    %8 = vsyncpa [#allocation3], 0
    %9 = vsyncpa [#allocation6], 0
    %10 = vsyncpa [#allocation4], 0
    // Predicated region
    $region2: #{linear_pallas.1} parent=1 // pred_check
      _
    $region3: #{linear_pallas.1} parent=1 // pred_check_branch
      %12 = sbr.rel (0) target = $region5
    $region4: #{linear_pallas.1} parent=1 // pred_region
      %s14 = ssub.s32 1024, 1024
      %15 = vsyncadd [#allocation3], %s14
      %s17 = sshll.u32 [#allocation2], 4
      %s18 = int_to_ptr.vmem [resolvable:$true] %s17
      %20 = dma.hbm_to_vmem [thread:$0]  %s0, 1024, %s18, [#allocation3]
    $region5: #{linear_pallas.1} parent=1 // pred_fallthru
      _
    // Predicated region
    $region6: #{linear_pallas.1} parent=1 // pred_check
      _
    $region7: #{linear_pallas.1} parent=1 // pred_check_branch
      %22 = sbr.rel (0) target = $region9
    $region8: #{linear_pallas.1} parent=1 // pred_region
      %s24 = ssub.s32 64000, 64000
      %25 = vsyncadd [#allocation6], %s24
      %s26 = sshll.u32 [#allocation5], 4
      %s27 = int_to_ptr.vmem [resolvable:$true] %s26
      %32 = dma.hbm_to_vmem [thread:$0]  %s1, 64000, %s27, [#allocation6], 512, 512, 32
    $region9: #{linear_pallas.1} parent=1 // pred_fallthru
      _
    // Predicated region
    $region10: #{linear_pallas.1} parent=1 // pred_check
      _
    $region11: #{linear_pallas.1} parent=1 // pred_check_branch
      %34 = sbr.rel (0) target = $region13
    $region12: #{linear_pallas.1} parent=1 // pred_region
      %s36 = ssub.s32 128, 128
      %37 = vsyncadd [#allocation6], %s36
      %s39 = sshll.u32 [#allocation7], 4
      %s40 = int_to_ptr.vmem [resolvable:$true] %s39
      %42 = dma.hbm_to_vmem [thread:$0]  %s2, 128, %s40, [#allocation6]
    $region13: #{linear_pallas.1} parent=1 // pred_fallthru
      _
    // Predicated region
    $region14: #{linear_pallas.1} parent=1 // pred_check
      _
    $region15: #{linear_pallas.1} parent=1 // pred_check_branch
      %44 = sbr.rel (0) target = $region17
    $region16: #{linear_pallas.1} parent=1 // pred_region
      %45 = dma.done [#allocation3], 1024
    $region17: #{linear_pallas.1} parent=1 // pred_fallthru
      _
    // Predicated region
    $region18: #{linear_pallas.1} parent=1 // pred_check
      _
    $region19: #{linear_pallas.1} parent=1 // pred_check_branch
      %47 = sbr.rel (0) target = $region21
    $region20: #{linear_pallas.1} parent=1 // pred_region
      %48 = dma.done [#allocation6], 64000
    $region21: #{linear_pallas.1} parent=1 // pred_fallthru
      _
    // Predicated region
    $region22: #{linear_pallas.1} parent=1 // pred_check
      _
    $region23: #{linear_pallas.1} parent=1 // pred_check_branch
      %50 = sbr.rel (0) target = $region25
    $region24: #{linear_pallas.1} parent=1 // pred_region
      %51 = dma.done [#allocation6], 128
    $region25: #{linear_pallas.1} parent=1 // pred_fallthru
      _
    %v53 = vld [vmem:[#allocation2] sm:$0xff]
    %v54 = vld [vmem:[#allocation2 + $0x8] sm:$0xff]
    %v55 = vld [vmem:[#allocation2 + $0x10] sm:$0xff]
    %v56 = vld [vmem:[#allocation2 + $0x18] sm:$0xff]
    %v57 = vld [vmem:[#allocation2 + $0x20] sm:$0xff]
    %v58 = vld [vmem:[#allocation2 + $0x28] sm:$0xff]
    %v59 = vld [vmem:[#allocation2 + $0x30] sm:$0xff]
    %v60 = vld [vmem:[#allocation2 + $0x38] sm:$0xff]
    %v61 = vpack.c.bf16 %v53, %v53
    %v62 = vpack.c.bf16 %v54, %v54
    %v63 = vpack.c.bf16 %v55, %v55
    %v64 = vpack.c.bf16 %v56, %v56
    %v65 = vpack.c.bf16 %v57, %v57
    %v66 = vpack.c.bf16 %v58, %v58
    %v67 = vpack.c.bf16 %v59, %v59
    %v68 = vpack.c.bf16 %v60, %v60
    %v69 = vld [vmem:[#allocation5] sm:$0xff]
    %v70 = vld [vmem:[#allocation5 + $0x8] sm:$0xff]
    %v71 = vld [vmem:[#allocation5 + $0x10] sm:$0xff]
    %v72 = vld [vmem:[#allocation5 + $0x18] sm:$0xff]
    %v73 = vld [vmem:[#allocation5 + $0x20] sm:$0xff]
    %v74 = vld [vmem:[#allocation5 + $0x28] sm:$0xff]
    %v75 = vld [vmem:[#allocation5 + $0x30] sm:$0xff]
    %v76 = vld [vmem:[#allocation5 + $0x38] sm:$0xff]
    %v77 = vld [vmem:[#allocation5 + $0x40] sm:$0xff]
    %v78 = vld [vmem:[#allocation5 + $0x48] sm:$0xff]
    %v79 = vld [vmem:[#allocation5 + $0x50] sm:$0xff]
    %v80 = vld [vmem:[#allocation5 + $0x58] sm:$0xff]
    %v81 = vld [vmem:[#allocation5 + $0x60] sm:$0xff]
    %v82 = vld [vmem:[#allocation5 + $0x68] sm:$0xff]
    %v83 = vld [vmem:[#allocation5 + $0x70] sm:$0xff]
    %v84 = vld [vmem:[#allocation5 + $0x78] sm:$0xff]
    %v85 = vld [vmem:[#allocation5 + $0x80] sm:$0xff]
    %v86 = vld [vmem:[#allocation5 + $0x88] sm:$0xff]
    %v87 = vld [vmem:[#allocation5 + $0x90] sm:$0xff]
    %v88 = vld [vmem:[#allocation5 + $0x98] sm:$0xff]
    %v89 = vld [vmem:[#allocation5 + $0xa0] sm:$0xff]
    %v90 = vld [vmem:[#allocation5 + $0xa8] sm:$0xff]
    %v91 = vld [vmem:[#allocation5 + $0xb0] sm:$0xff]
    %v92 = vld [vmem:[#allocation5 + $0xb8] sm:$0xff]
    %v93 = vld [vmem:[#allocation5 + $0xc0] sm:$0xff]
    %v94 = vld [vmem:[#allocation5 + $0xc8] sm:$0xff]
    %v95 = vld [vmem:[#allocation5 + $0xd0] sm:$0xff]
    %v96 = vld [vmem:[#allocation5 + $0xd8] sm:$0xff]
    %v97 = vld [vmem:[#allocation5 + $0xe0] sm:$0xff]
    %v98 = vld [vmem:[#allocation5 + $0xe8] sm:$0xff]
    %v99 = vld [vmem:[#allocation5 + $0xf0] sm:$0xff]
    %v100 = vld [vmem:[#allocation5 + $0xf8] sm:$0xff]
    %v101 = vld [vmem:[#allocation5 + $0x100] sm:$0xff]
    %v102 = vld [vmem:[#allocation5 + $0x108] sm:$0xff]
    %v103 = vld [vmem:[#allocation5 + $0x110] sm:$0xff]
    %v104 = vld [vmem:[#allocation5 + $0x118] sm:$0xff]
    %v105 = vld [vmem:[#allocation5 + $0x120] sm:$0xff]
    %v106 = vld [vmem:[#allocation5 + $0x128] sm:$0xff]
    %v107 = vld [vmem:[#allocation5 + $0x130] sm:$0xff]
    %v108 = vld [vmem:[#allocation5 + $0x138] sm:$0xff]
    %v109 = vld [vmem:[#allocation5 + $0x140] sm:$0xff]
    %v110 = vld [vmem:[#allocation5 + $0x148] sm:$0xff]
    %v111 = vld [vmem:[#allocation5 + $0x150] sm:$0xff]
    %v112 = vld [vmem:[#allocation5 + $0x158] sm:$0xff]
    %v113 = vld [vmem:[#allocation5 + $0x160] sm:$0xff]
    %v114 = vld [vmem:[#allocation5 + $0x168] sm:$0xff]
    %v115 = vld [vmem:[#allocation5 + $0x170] sm:$0xff]
    %v116 = vld [vmem:[#allocation5 + $0x178] sm:$0xff]
    %v117 = vld [vmem:[#allocation5 + $0x180] sm:$0xff]
    %v118 = vld [vmem:[#allocation5 + $0x188] sm:$0xff]
    %v119 = vld [vmem:[#allocation5 + $0x190] sm:$0xff]
    %v120 = vld [vmem:[#allocation5 + $0x198] sm:$0xff]
    %v121 = vld [vmem:[#allocation5 + $0x1a0] sm:$0xff]
    %v122 = vld [vmem:[#allocation5 + $0x1a8] sm:$0xff]
    %v123 = vld [vmem:[#allocation5 + $0x1b0] sm:$0xff]
    %v124 = vld [vmem:[#allocation5 + $0x1b8] sm:$0xff]
    %v125 = vld [vmem:[#allocation5 + $0x1c0] sm:$0xff]
    %v126 = vld [vmem:[#allocation5 + $0x1c8] sm:$0xff]
    %v127 = vld [vmem:[#allocation5 + $0x1d0] sm:$0xff]
    %v128 = vld [vmem:[#allocation5 + $0x1d8] sm:$0xff]
    %v129 = vld [vmem:[#allocation5 + $0x1e0] sm:$0xff]
    %v130 = vld [vmem:[#allocation5 + $0x1e8] sm:$0xff]
    %v131 = vld [vmem:[#allocation5 + $0x1f0] sm:$0xff]
    %v132 = vld [vmem:[#allocation5 + $0x1f8] sm:$0xff]
    %v133 = vld [vmem:[#allocation5 + $0x200] sm:$0xff]
    %v134 = vld [vmem:[#allocation5 + $0x208] sm:$0xff]
    %v135 = vld [vmem:[#allocation5 + $0x210] sm:$0xff]
    %v136 = vld [vmem:[#allocation5 + $0x218] sm:$0xff]
    %v137 = vld [vmem:[#allocation5 + $0x220] sm:$0xff]
    %v138 = vld [vmem:[#allocation5 + $0x228] sm:$0xff]
    %v139 = vld [vmem:[#allocation5 + $0x230] sm:$0xff]
    %v140 = vld [vmem:[#allocation5 + $0x238] sm:$0xff]
    %v141 = vld [vmem:[#allocation5 + $0x240] sm:$0xff]
    %v142 = vld [vmem:[#allocation5 + $0x248] sm:$0xff]
    %v143 = vld [vmem:[#allocation5 + $0x250] sm:$0xff]
    %v144 = vld [vmem:[#allocation5 + $0x258] sm:$0xff]
    %v145 = vld [vmem:[#allocation5 + $0x260] sm:$0xff]
    %v146 = vld [vmem:[#allocation5 + $0x268] sm:$0xff]
    %v147 = vld [vmem:[#allocation5 + $0x270] sm:$0xff]
    %v148 = vld [vmem:[#allocation5 + $0x278] sm:$0xff]
    %v149 = vld [vmem:[#allocation5 + $0x280] sm:$0xff]
    %v150 = vld [vmem:[#allocation5 + $0x288] sm:$0xff]
    %v151 = vld [vmem:[#allocation5 + $0x290] sm:$0xff]
    %v152 = vld [vmem:[#allocation5 + $0x298] sm:$0xff]
    %v153 = vld [vmem:[#allocation5 + $0x2a0] sm:$0xff]
    %v154 = vld [vmem:[#allocation5 + $0x2a8] sm:$0xff]
    %v155 = vld [vmem:[#allocation5 + $0x2b0] sm:$0xff]
    %v156 = vld [vmem:[#allocation5 + $0x2b8] sm:$0xff]
    %v157 = vld [vmem:[#allocation5 + $0x2c0] sm:$0xff]
    %v158 = vld [vmem:[#allocation5 + $0x2c8] sm:$0xff]
    %v159 = vld [vmem:[#allocation5 + $0x2d0] sm:$0xff]
    %v160 = vld [vmem:[#allocation5 + $0x2d8] sm:$0xff]
    %v161 = vld [vmem:[#allocation5 + $0x2e0] sm:$0xff]
    %v162 = vld [vmem:[#allocation5 + $0x2e8] sm:$0xff]
    %v163 = vld [vmem:[#allocation5 + $0x2f0] sm:$0xff]
    %v164 = vld [vmem:[#allocation5 + $0x2f8] sm:$0xff]
    %v165 = vld [vmem:[#allocation5 + $0x300] sm:$0xff]
    %v166 = vld [vmem:[#allocation5 + $0x308] sm:$0xff]
    %v167 = vld [vmem:[#allocation5 + $0x310] sm:$0xff]
    %v168 = vld [vmem:[#allocation5 + $0x318] sm:$0xff]
    %v169 = vld [vmem:[#allocation5 + $0x320] sm:$0xff]
    %v170 = vld [vmem:[#allocation5 + $0x328] sm:$0xff]
    %v171 = vld [vmem:[#allocation5 + $0x330] sm:$0xff]
    %v172 = vld [vmem:[#allocation5 + $0x338] sm:$0xff]
    %v173 = vld [vmem:[#allocation5 + $0x340] sm:$0xff]
    %v174 = vld [vmem:[#allocation5 + $0x348] sm:$0xff]
    %v175 = vld [vmem:[#allocation5 + $0x350] sm:$0xff]
    %v176 = vld [vmem:[#allocation5 + $0x358] sm:$0xff]
    %v177 = vld [vmem:[#allocation5 + $0x360] sm:$0xff]
    %v178 = vld [vmem:[#allocation5 + $0x368] sm:$0xff]
    %v179 = vld [vmem:[#allocation5 + $0x370] sm:$0xff]
    %v180 = vld [vmem:[#allocation5 + $0x378] sm:$0xff]
    %v181 = vld [vmem:[#allocation5 + $0x380] sm:$0xff]
    %v182 = vld [vmem:[#allocation5 + $0x388] sm:$0xff]
    %v183 = vld [vmem:[#allocation5 + $0x390] sm:$0xff]
    %v184 = vld [vmem:[#allocation5 + $0x398] sm:$0xff]
    %v185 = vld [vmem:[#allocation5 + $0x3a0] sm:$0xff]
    %v186 = vld [vmem:[#allocation5 + $0x3a8] sm:$0xff]
    %v187 = vld [vmem:[#allocation5 + $0x3b0] sm:$0xff]
    %v188 = vld [vmem:[#allocation5 + $0x3b8] sm:$0xff]
    %v189 = vld [vmem:[#allocation5 + $0x3c0] sm:$0xff]
    %v190 = vld [vmem:[#allocation5 + $0x3c8] sm:$0xff]
    %v191 = vld [vmem:[#allocation5 + $0x3d0] sm:$0xff]
    %v192 = vld [vmem:[#allocation5 + $0x3d8] sm:$0xff]
    %v193 = vld [vmem:[#allocation5 + $0x3e0] sm:$0xff]
    %v194 = vld [vmem:[#allocation5 + $0x3e8] sm:$0xff]
    %v195 = vld [vmem:[#allocation5 + $0x3f0] sm:$0xff]
    %v196 = vld [vmem:[#allocation5 + $0x3f8] sm:$0xff]
    %v197 = vld [vmem:[#allocation5 + $0x400] sm:$0xff]
    %v198 = vld [vmem:[#allocation5 + $0x408] sm:$0xff]
    %v199 = vld [vmem:[#allocation5 + $0x410] sm:$0xff]
    %v200 = vld [vmem:[#allocation5 + $0x418] sm:$0xff]
    %v201 = vld [vmem:[#allocation5 + $0x420] sm:$0xff]
    %v202 = vld [vmem:[#allocation5 + $0x428] sm:$0xff]
    %v203 = vld [vmem:[#allocation5 + $0x430] sm:$0xff]
    %v204 = vld [vmem:[#allocation5 + $0x438] sm:$0xff]
    %v205 = vld [vmem:[#allocation5 + $0x440] sm:$0xff]
    %v206 = vld [vmem:[#allocation5 + $0x448] sm:$0xff]
    %v207 = vld [vmem:[#allocation5 + $0x450] sm:$0xff]
    %v208 = vld [vmem:[#allocation5 + $0x458] sm:$0xff]
    %v209 = vld [vmem:[#allocation5 + $0x460] sm:$0xff]
    %v210 = vld [vmem:[#allocation5 + $0x468] sm:$0xff]
    %v211 = vld [vmem:[#allocation5 + $0x470] sm:$0xff]
    %v212 = vld [vmem:[#allocation5 + $0x478] sm:$0xff]
    %v213 = vld [vmem:[#allocation5 + $0x480] sm:$0xff]
    %v214 = vld [vmem:[#allocation5 + $0x488] sm:$0xff]
    %v215 = vld [vmem:[#allocation5 + $0x490] sm:$0xff]
    %v216 = vld [vmem:[#allocation5 + $0x498] sm:$0xff]
    %v217 = vld [vmem:[#allocation5 + $0x4a0] sm:$0xff]
    %v218 = vld [vmem:[#allocation5 + $0x4a8] sm:$0xff]
    %v219 = vld [vmem:[#allocation5 + $0x4b0] sm:$0xff]
    %v220 = vld [vmem:[#allocation5 + $0x4b8] sm:$0xff]
    %v221 = vld [vmem:[#allocation5 + $0x4c0] sm:$0xff]
    %v222 = vld [vmem:[#allocation5 + $0x4c8] sm:$0xff]
    %v223 = vld [vmem:[#allocation5 + $0x4d0] sm:$0xff]
    %v224 = vld [vmem:[#allocation5 + $0x4d8] sm:$0xff]
    %v225 = vld [vmem:[#allocation5 + $0x4e0] sm:$0xff]
    %v226 = vld [vmem:[#allocation5 + $0x4e8] sm:$0xff]
    %v227 = vld [vmem:[#allocation5 + $0x4f0] sm:$0xff]
    %v228 = vld [vmem:[#allocation5 + $0x4f8] sm:$0xff]
    %v229 = vld [vmem:[#allocation5 + $0x500] sm:$0xff]
    %v230 = vld [vmem:[#allocation5 + $0x508] sm:$0xff]
    %v231 = vld [vmem:[#allocation5 + $0x510] sm:$0xff]
    %v232 = vld [vmem:[#allocation5 + $0x518] sm:$0xff]
    %v233 = vld [vmem:[#allocation5 + $0x520] sm:$0xff]
    %v234 = vld [vmem:[#allocation5 + $0x528] sm:$0xff]
    %v235 = vld [vmem:[#allocation5 + $0x530] sm:$0xff]
    %v236 = vld [vmem:[#allocation5 + $0x538] sm:$0xff]
    %v237 = vld [vmem:[#allocation5 + $0x540] sm:$0xff]
    %v238 = vld [vmem:[#allocation5 + $0x548] sm:$0xff]
    %v239 = vld [vmem:[#allocation5 + $0x550] sm:$0xff]
    %v240 = vld [vmem:[#allocation5 + $0x558] sm:$0xff]
    %v241 = vld [vmem:[#allocation5 + $0x560] sm:$0xff]
    %v242 = vld [vmem:[#allocation5 + $0x568] sm:$0xff]
    %v243 = vld [vmem:[#allocation5 + $0x570] sm:$0xff]
    %v244 = vld [vmem:[#allocation5 + $0x578] sm:$0xff]
    %v245 = vld [vmem:[#allocation5 + $0x580] sm:$0xff]
    %v246 = vld [vmem:[#allocation5 + $0x588] sm:$0xff]
    %v247 = vld [vmem:[#allocation5 + $0x590] sm:$0xff]
    %v248 = vld [vmem:[#allocation5 + $0x598] sm:$0xff]
    %v249 = vld [vmem:[#allocation5 + $0x5a0] sm:$0xff]
    %v250 = vld [vmem:[#allocation5 + $0x5a8] sm:$0xff]
    %v251 = vld [vmem:[#allocation5 + $0x5b0] sm:$0xff]
    %v252 = vld [vmem:[#allocation5 + $0x5b8] sm:$0xff]
    %v253 = vld [vmem:[#allocation5 + $0x5c0] sm:$0xff]
    %v254 = vld [vmem:[#allocation5 + $0x5c8] sm:$0xff]
    %v255 = vld [vmem:[#allocation5 + $0x5d0] sm:$0xff]
    %v256 = vld [vmem:[#allocation5 + $0x5d8] sm:$0xff]
    %v257 = vld [vmem:[#allocation5 + $0x5e0] sm:$0xff]
    %v258 = vld [vmem:[#allocation5 + $0x5e8] sm:$0xff]
    %v259 = vld [vmem:[#allocation5 + $0x5f0] sm:$0xff]
    %v260 = vld [vmem:[#allocation5 + $0x5f8] sm:$0xff]
    %v261 = vld [vmem:[#allocation5 + $0x600] sm:$0xff]
    %v262 = vld [vmem:[#allocation5 + $0x608] sm:$0xff]
    %v263 = vld [vmem:[#allocation5 + $0x610] sm:$0xff]
    %v264 = vld [vmem:[#allocation5 + $0x618] sm:$0xff]
    %v265 = vld [vmem:[#allocation5 + $0x620] sm:$0xff]
    %v266 = vld [vmem:[#allocation5 + $0x628] sm:$0xff]
    %v267 = vld [vmem:[#allocation5 + $0x630] sm:$0xff]
    %v268 = vld [vmem:[#allocation5 + $0x638] sm:$0xff]
    %v269 = vld [vmem:[#allocation5 + $0x640] sm:$0xff]
    %v270 = vld [vmem:[#allocation5 + $0x648] sm:$0xff]
    %v271 = vld [vmem:[#allocation5 + $0x650] sm:$0xff]
    %v272 = vld [vmem:[#allocation5 + $0x658] sm:$0xff]
    %v273 = vld [vmem:[#allocation5 + $0x660] sm:$0xff]
    %v274 = vld [vmem:[#allocation5 + $0x668] sm:$0xff]
    %v275 = vld [vmem:[#allocation5 + $0x670] sm:$0xff]
    %v276 = vld [vmem:[#allocation5 + $0x678] sm:$0xff]
    %v277 = vld [vmem:[#allocation5 + $0x680] sm:$0xff]
    %v278 = vld [vmem:[#allocation5 + $0x688] sm:$0xff]
    %v279 = vld [vmem:[#allocation5 + $0x690] sm:$0xff]
    %v280 = vld [vmem:[#allocation5 + $0x698] sm:$0xff]
    %v281 = vld [vmem:[#allocation5 + $0x6a0] sm:$0xff]
    %v282 = vld [vmem:[#allocation5 + $0x6a8] sm:$0xff]
    %v283 = vld [vmem:[#allocation5 + $0x6b0] sm:$0xff]
    %v284 = vld [vmem:[#allocation5 + $0x6b8] sm:$0xff]
    %v285 = vld [vmem:[#allocation5 + $0x6c0] sm:$0xff]
    %v286 = vld [vmem:[#allocation5 + $0x6c8] sm:$0xff]
    %v287 = vld [vmem:[#allocation5 + $0x6d0] sm:$0xff]
    %v288 = vld [vmem:[#allocation5 + $0x6d8] sm:$0xff]
    %v289 = vld [vmem:[#allocation5 + $0x6e0] sm:$0xff]
    %v290 = vld [vmem:[#allocation5 + $0x6e8] sm:$0xff]
    %v291 = vld [vmem:[#allocation5 + $0x6f0] sm:$0xff]
    %v292 = vld [vmem:[#allocation5 + $0x6f8] sm:$0xff]
    %v293 = vld [vmem:[#allocation5 + $0x700] sm:$0xff]
    %v294 = vld [vmem:[#allocation5 + $0x708] sm:$0xff]
    %v295 = vld [vmem:[#allocation5 + $0x710] sm:$0xff]
    %v296 = vld [vmem:[#allocation5 + $0x718] sm:$0xff]
    %v297 = vld [vmem:[#allocation5 + $0x720] sm:$0xff]
    %v298 = vld [vmem:[#allocation5 + $0x728] sm:$0xff]
    %v299 = vld [vmem:[#allocation5 + $0x730] sm:$0xff]
    %v300 = vld [vmem:[#allocation5 + $0x738] sm:$0xff]
    %v301 = vld [vmem:[#allocation5 + $0x740] sm:$0xff]
    %v302 = vld [vmem:[#allocation5 + $0x748] sm:$0xff]
    %v303 = vld [vmem:[#allocation5 + $0x750] sm:$0xff]
    %v304 = vld [vmem:[#allocation5 + $0x758] sm:$0xff]
    %v305 = vld [vmem:[#allocation5 + $0x760] sm:$0xff]
    %v306 = vld [vmem:[#allocation5 + $0x768] sm:$0xff]
    %v307 = vld [vmem:[#allocation5 + $0x770] sm:$0xff]
    %v308 = vld [vmem:[#allocation5 + $0x778] sm:$0xff]
    %v309 = vld [vmem:[#allocation5 + $0x780] sm:$0xff]
    %v310 = vld [vmem:[#allocation5 + $0x788] sm:$0xff]
    %v311 = vld [vmem:[#allocation5 + $0x790] sm:$0xff]
    %v312 = vld [vmem:[#allocation5 + $0x798] sm:$0xff]
    %v313 = vld [vmem:[#allocation5 + $0x7a0] sm:$0xff]
    %v314 = vld [vmem:[#allocation5 + $0x7a8] sm:$0xff]
    %v315 = vld [vmem:[#allocation5 + $0x7b0] sm:$0xff]
    %v316 = vld [vmem:[#allocation5 + $0x7b8] sm:$0xff]
    %v317 = vld [vmem:[#allocation5 + $0x7c0] sm:$0xff]
    %v318 = vld [vmem:[#allocation5 + $0x7c8] sm:$0xff]
    %v319 = vld [vmem:[#allocation5 + $0x7d0] sm:$0xff]
    %v320 = vld [vmem:[#allocation5 + $0x7d8] sm:$0xff]
    %v321 = vld [vmem:[#allocation5 + $0x7e0] sm:$0xff]
    %v322 = vld [vmem:[#allocation5 + $0x7e8] sm:$0xff]
    %v323 = vld [vmem:[#allocation5 + $0x7f0] sm:$0xff]
    %v324 = vld [vmem:[#allocation5 + $0x7f8] sm:$0xff]
    %v325 = vld [vmem:[#allocation5 + $0x800] sm:$0xff]
    %v326 = vld [vmem:[#allocation5 + $0x808] sm:$0xff]
    %v327 = vld [vmem:[#allocation5 + $0x810] sm:$0xff]
    %v328 = vld [vmem:[#allocation5 + $0x818] sm:$0xff]
    %v329 = vld [vmem:[#allocation5 + $0x820] sm:$0xff]
    %v330 = vld [vmem:[#allocation5 + $0x828] sm:$0xff]
    %v331 = vld [vmem:[#allocation5 + $0x830] sm:$0xff]
    %v332 = vld [vmem:[#allocation5 + $0x838] sm:$0xff]
    %v333 = vld [vmem:[#allocation5 + $0x840] sm:$0xff]
    %v334 = vld [vmem:[#allocation5 + $0x848] sm:$0xff]
    %v335 = vld [vmem:[#allocation5 + $0x850] sm:$0xff]
    %v336 = vld [vmem:[#allocation5 + $0x858] sm:$0xff]
    %v337 = vld [vmem:[#allocation5 + $0x860] sm:$0xff]
    %v338 = vld [vmem:[#allocation5 + $0x868] sm:$0xff]
    %v339 = vld [vmem:[#allocation5 + $0x870] sm:$0xff]
    %v340 = vld [vmem:[#allocation5 + $0x878] sm:$0xff]
    %v341 = vld [vmem:[#allocation5 + $0x880] sm:$0xff]
    %v342 = vld [vmem:[#allocation5 + $0x888] sm:$0xff]
    %v343 = vld [vmem:[#allocation5 + $0x890] sm:$0xff]
    %v344 = vld [vmem:[#allocation5 + $0x898] sm:$0xff]
    %v345 = vld [vmem:[#allocation5 + $0x8a0] sm:$0xff]
    %v346 = vld [vmem:[#allocation5 + $0x8a8] sm:$0xff]
    %v347 = vld [vmem:[#allocation5 + $0x8b0] sm:$0xff]
    %v348 = vld [vmem:[#allocation5 + $0x8b8] sm:$0xff]
    %v349 = vld [vmem:[#allocation5 + $0x8c0] sm:$0xff]
    %v350 = vld [vmem:[#allocation5 + $0x8c8] sm:$0xff]
    %v351 = vld [vmem:[#allocation5 + $0x8d0] sm:$0xff]
    %v352 = vld [vmem:[#allocation5 + $0x8d8] sm:$0xff]
    %v353 = vld [vmem:[#allocation5 + $0x8e0] sm:$0xff]
    %v354 = vld [vmem:[#allocation5 + $0x8e8] sm:$0xff]
    %v355 = vld [vmem:[#allocation5 + $0x8f0] sm:$0xff]
    %v356 = vld [vmem:[#allocation5 + $0x8f8] sm:$0xff]
    %v357 = vld [vmem:[#allocation5 + $0x900] sm:$0xff]
    %v358 = vld [vmem:[#allocation5 + $0x908] sm:$0xff]
    %v359 = vld [vmem:[#allocation5 + $0x910] sm:$0xff]
    %v360 = vld [vmem:[#allocation5 + $0x918] sm:$0xff]
    %v361 = vld [vmem:[#allocation5 + $0x920] sm:$0xff]
    %v362 = vld [vmem:[#allocation5 + $0x928] sm:$0xff]
    %v363 = vld [vmem:[#allocation5 + $0x930] sm:$0xff]
    %v364 = vld [vmem:[#allocation5 + $0x938] sm:$0xff]
    %v365 = vld [vmem:[#allocation5 + $0x940] sm:$0xff]
    %v366 = vld [vmem:[#allocation5 + $0x948] sm:$0xff]
    %v367 = vld [vmem:[#allocation5 + $0x950] sm:$0xff]
    %v368 = vld [vmem:[#allocation5 + $0x958] sm:$0xff]
    %v369 = vld [vmem:[#allocation5 + $0x960] sm:$0xff]
    %v370 = vld [vmem:[#allocation5 + $0x968] sm:$0xff]
    %v371 = vld [vmem:[#allocation5 + $0x970] sm:$0xff]
    %v372 = vld [vmem:[#allocation5 + $0x978] sm:$0xff]
    %v373 = vld [vmem:[#allocation5 + $0x980] sm:$0xff]
    %v374 = vld [vmem:[#allocation5 + $0x988] sm:$0xff]
    %v375 = vld [vmem:[#allocation5 + $0x990] sm:$0xff]
    %v376 = vld [vmem:[#allocation5 + $0x998] sm:$0xff]
    %v377 = vld [vmem:[#allocation5 + $0x9a0] sm:$0xff]
    %v378 = vld [vmem:[#allocation5 + $0x9a8] sm:$0xff]
    %v379 = vld [vmem:[#allocation5 + $0x9b0] sm:$0xff]
    %v380 = vld [vmem:[#allocation5 + $0x9b8] sm:$0xff]
    %v381 = vld [vmem:[#allocation5 + $0x9c0] sm:$0xff]
    %v382 = vld [vmem:[#allocation5 + $0x9c8] sm:$0xff]
    %v383 = vld [vmem:[#allocation5 + $0x9d0] sm:$0xff]
    %v384 = vld [vmem:[#allocation5 + $0x9d8] sm:$0xff]
    %v385 = vld [vmem:[#allocation5 + $0x9e0] sm:$0xff]
    %v386 = vld [vmem:[#allocation5 + $0x9e8] sm:$0xff]
    %v387 = vld [vmem:[#allocation5 + $0x9f0] sm:$0xff]
    %v388 = vld [vmem:[#allocation5 + $0x9f8] sm:$0xff]
    %v389 = vld [vmem:[#allocation5 + $0xa00] sm:$0xff]
    %v390 = vld [vmem:[#allocation5 + $0xa08] sm:$0xff]
    %v391 = vld [vmem:[#allocation5 + $0xa10] sm:$0xff]
    %v392 = vld [vmem:[#allocation5 + $0xa18] sm:$0xff]
    %v393 = vld [vmem:[#allocation5 + $0xa20] sm:$0xff]
    %v394 = vld [vmem:[#allocation5 + $0xa28] sm:$0xff]
    %v395 = vld [vmem:[#allocation5 + $0xa30] sm:$0xff]
    %v396 = vld [vmem:[#allocation5 + $0xa38] sm:$0xff]
    %v397 = vld [vmem:[#allocation5 + $0xa40] sm:$0xff]
    %v398 = vld [vmem:[#allocation5 + $0xa48] sm:$0xff]
    %v399 = vld [vmem:[#allocation5 + $0xa50] sm:$0xff]
    %v400 = vld [vmem:[#allocation5 + $0xa58] sm:$0xff]
    %v401 = vld [vmem:[#allocation5 + $0xa60] sm:$0xff]
    %v402 = vld [vmem:[#allocation5 + $0xa68] sm:$0xff]
    %v403 = vld [vmem:[#allocation5 + $0xa70] sm:$0xff]
    %v404 = vld [vmem:[#allocation5 + $0xa78] sm:$0xff]
    %v405 = vld [vmem:[#allocation5 + $0xa80] sm:$0xff]
    %v406 = vld [vmem:[#allocation5 + $0xa88] sm:$0xff]
    %v407 = vld [vmem:[#allocation5 + $0xa90] sm:$0xff]
    %v408 = vld [vmem:[#allocation5 + $0xa98] sm:$0xff]
    %v409 = vld [vmem:[#allocation5 + $0xaa0] sm:$0xff]
    %v410 = vld [vmem:[#allocation5 + $0xaa8] sm:$0xff]
    %v411 = vld [vmem:[#allocation5 + $0xab0] sm:$0xff]
    %v412 = vld [vmem:[#allocation5 + $0xab8] sm:$0xff]
    %v413 = vld [vmem:[#allocation5 + $0xac0] sm:$0xff]
    %v414 = vld [vmem:[#allocation5 + $0xac8] sm:$0xff]
    %v415 = vld [vmem:[#allocation5 + $0xad0] sm:$0xff]
    %v416 = vld [vmem:[#allocation5 + $0xad8] sm:$0xff]
    %v417 = vld [vmem:[#allocation5 + $0xae0] sm:$0xff]
    %v418 = vld [vmem:[#allocation5 + $0xae8] sm:$0xff]
    %v419 = vld [vmem:[#allocation5 + $0xaf0] sm:$0xff]
    %v420 = vld [vmem:[#allocation5 + $0xaf8] sm:$0xff]
    %v421 = vld [vmem:[#allocation5 + $0xb00] sm:$0xff]
    %v422 = vld [vmem:[#allocation5 + $0xb08] sm:$0xff]
    %v423 = vld [vmem:[#allocation5 + $0xb10] sm:$0xff]
    %v424 = vld [vmem:[#allocation5 + $0xb18] sm:$0xff]
    %v425 = vld [vmem:[#allocation5 + $0xb20] sm:$0xff]
    %v426 = vld [vmem:[#allocation5 + $0xb28] sm:$0xff]
    %v427 = vld [vmem:[#allocation5 + $0xb30] sm:$0xff]
    %v428 = vld [vmem:[#allocation5 + $0xb38] sm:$0xff]
    %v429 = vld [vmem:[#allocation5 + $0xb40] sm:$0xff]
    %v430 = vld [vmem:[#allocation5 + $0xb48] sm:$0xff]
    %v431 = vld [vmem:[#allocation5 + $0xb50] sm:$0xff]
    %v432 = vld [vmem:[#allocation5 + $0xb58] sm:$0xff]
    %v433 = vld [vmem:[#allocation5 + $0xb60] sm:$0xff]
    %v434 = vld [vmem:[#allocation5 + $0xb68] sm:$0xff]
    %v435 = vld [vmem:[#allocation5 + $0xb70] sm:$0xff]
    %v436 = vld [vmem:[#allocation5 + $0xb78] sm:$0xff]
    %v437 = vld [vmem:[#allocation5 + $0xb80] sm:$0xff]
    %v438 = vld [vmem:[#allocation5 + $0xb88] sm:$0xff]
    %v439 = vld [vmem:[#allocation5 + $0xb90] sm:$0xff]
    %v440 = vld [vmem:[#allocation5 + $0xb98] sm:$0xff]
    %v441 = vld [vmem:[#allocation5 + $0xba0] sm:$0xff]
    %v442 = vld [vmem:[#allocation5 + $0xba8] sm:$0xff]
    %v443 = vld [vmem:[#allocation5 + $0xbb0] sm:$0xff]
    %v444 = vld [vmem:[#allocation5 + $0xbb8] sm:$0xff]
    %v445 = vld [vmem:[#allocation5 + $0xbc0] sm:$0xff]
    %v446 = vld [vmem:[#allocation5 + $0xbc8] sm:$0xff]
    %v447 = vld [vmem:[#allocation5 + $0xbd0] sm:$0xff]
    %v448 = vld [vmem:[#allocation5 + $0xbd8] sm:$0xff]
    %v449 = vld [vmem:[#allocation5 + $0xbe0] sm:$0xff]
    %v450 = vld [vmem:[#allocation5 + $0xbe8] sm:$0xff]
    %v451 = vld [vmem:[#allocation5 + $0xbf0] sm:$0xff]
    %v452 = vld [vmem:[#allocation5 + $0xbf8] sm:$0xff]
    %v453 = vld [vmem:[#allocation5 + $0xc00] sm:$0xff]
    %v454 = vld [vmem:[#allocation5 + $0xc08] sm:$0xff]
    %v455 = vld [vmem:[#allocation5 + $0xc10] sm:$0xff]
    %v456 = vld [vmem:[#allocation5 + $0xc18] sm:$0xff]
    %v457 = vld [vmem:[#allocation5 + $0xc20] sm:$0xff]
    %v458 = vld [vmem:[#allocation5 + $0xc28] sm:$0xff]
    %v459 = vld [vmem:[#allocation5 + $0xc30] sm:$0xff]
    %v460 = vld [vmem:[#allocation5 + $0xc38] sm:$0xff]
    %v461 = vld [vmem:[#allocation5 + $0xc40] sm:$0xff]
    %v462 = vld [vmem:[#allocation5 + $0xc48] sm:$0xff]
    %v463 = vld [vmem:[#allocation5 + $0xc50] sm:$0xff]
    %v464 = vld [vmem:[#allocation5 + $0xc58] sm:$0xff]
    %v465 = vld [vmem:[#allocation5 + $0xc60] sm:$0xff]
    %v466 = vld [vmem:[#allocation5 + $0xc68] sm:$0xff]
    %v467 = vld [vmem:[#allocation5 + $0xc70] sm:$0xff]
    %v468 = vld [vmem:[#allocation5 + $0xc78] sm:$0xff]
    %v469 = vld [vmem:[#allocation5 + $0xc80] sm:$0xff]
    %v470 = vld [vmem:[#allocation5 + $0xc88] sm:$0xff]
    %v471 = vld [vmem:[#allocation5 + $0xc90] sm:$0xff]
    %v472 = vld [vmem:[#allocation5 + $0xc98] sm:$0xff]
    %v473 = vld [vmem:[#allocation5 + $0xca0] sm:$0xff]
    %v474 = vld [vmem:[#allocation5 + $0xca8] sm:$0xff]
    %v475 = vld [vmem:[#allocation5 + $0xcb0] sm:$0xff]
    %v476 = vld [vmem:[#allocation5 + $0xcb8] sm:$0xff]
    %v477 = vld [vmem:[#allocation5 + $0xcc0] sm:$0xff]
    %v478 = vld [vmem:[#allocation5 + $0xcc8] sm:$0xff]
    %v479 = vld [vmem:[#allocation5 + $0xcd0] sm:$0xff]
    %v480 = vld [vmem:[#allocation5 + $0xcd8] sm:$0xff]
    %v481 = vld [vmem:[#allocation5 + $0xce0] sm:$0xff]
    %v482 = vld [vmem:[#allocation5 + $0xce8] sm:$0xff]
    %v483 = vld [vmem:[#allocation5 + $0xcf0] sm:$0xff]
    %v484 = vld [vmem:[#allocation5 + $0xcf8] sm:$0xff]
    %v485 = vld [vmem:[#allocation5 + $0xd00] sm:$0xff]
    %v486 = vld [vmem:[#allocation5 + $0xd08] sm:$0xff]
    %v487 = vld [vmem:[#allocation5 + $0xd10] sm:$0xff]
    %v488 = vld [vmem:[#allocation5 + $0xd18] sm:$0xff]
    %v489 = vld [vmem:[#allocation5 + $0xd20] sm:$0xff]
    %v490 = vld [vmem:[#allocation5 + $0xd28] sm:$0xff]
    %v491 = vld [vmem:[#allocation5 + $0xd30] sm:$0xff]
    %v492 = vld [vmem:[#allocation5 + $0xd38] sm:$0xff]
    %v493 = vld [vmem:[#allocation5 + $0xd40] sm:$0xff]
    %v494 = vld [vmem:[#allocation5 + $0xd48] sm:$0xff]
    %v495 = vld [vmem:[#allocation5 + $0xd50] sm:$0xff]
    %v496 = vld [vmem:[#allocation5 + $0xd58] sm:$0xff]
    %v497 = vld [vmem:[#allocation5 + $0xd60] sm:$0xff]
    %v498 = vld [vmem:[#allocation5 + $0xd68] sm:$0xff]
    %v499 = vld [vmem:[#allocation5 + $0xd70] sm:$0xff]
    %v500 = vld [vmem:[#allocation5 + $0xd78] sm:$0xff]
    %v501 = vld [vmem:[#allocation5 + $0xd80] sm:$0xff]
    %v502 = vld [vmem:[#allocation5 + $0xd88] sm:$0xff]
    %v503 = vld [vmem:[#allocation5 + $0xd90] sm:$0xff]
    %v504 = vld [vmem:[#allocation5 + $0xd98] sm:$0xff]
    %v505 = vld [vmem:[#allocation5 + $0xda0] sm:$0xff]
    %v506 = vld [vmem:[#allocation5 + $0xda8] sm:$0xff]
    %v507 = vld [vmem:[#allocation5 + $0xdb0] sm:$0xff]
    %v508 = vld [vmem:[#allocation5 + $0xdb8] sm:$0xff]
    %v509 = vld [vmem:[#allocation5 + $0xdc0] sm:$0xff]
    %v510 = vld [vmem:[#allocation5 + $0xdc8] sm:$0xff]
    %v511 = vld [vmem:[#allocation5 + $0xdd0] sm:$0xff]
    %v512 = vld [vmem:[#allocation5 + $0xdd8] sm:$0xff]
    %v513 = vld [vmem:[#allocation5 + $0xde0] sm:$0xff]
    %v514 = vld [vmem:[#allocation5 + $0xde8] sm:$0xff]
    %v515 = vld [vmem:[#allocation5 + $0xdf0] sm:$0xff]
    %v516 = vld [vmem:[#allocation5 + $0xdf8] sm:$0xff]
    %v517 = vld [vmem:[#allocation5 + $0xe00] sm:$0xff]
    %v518 = vld [vmem:[#allocation5 + $0xe08] sm:$0xff]
    %v519 = vld [vmem:[#allocation5 + $0xe10] sm:$0xff]
    %v520 = vld [vmem:[#allocation5 + $0xe18] sm:$0xff]
    %v521 = vld [vmem:[#allocation5 + $0xe20] sm:$0xff]
    %v522 = vld [vmem:[#allocation5 + $0xe28] sm:$0xff]
    %v523 = vld [vmem:[#allocation5 + $0xe30] sm:$0xff]
    %v524 = vld [vmem:[#allocation5 + $0xe38] sm:$0xff]
    %v525 = vld [vmem:[#allocation5 + $0xe40] sm:$0xff]
    %v526 = vld [vmem:[#allocation5 + $0xe48] sm:$0xff]
    %v527 = vld [vmem:[#allocation5 + $0xe50] sm:$0xff]
    %v528 = vld [vmem:[#allocation5 + $0xe58] sm:$0xff]
    %v529 = vld [vmem:[#allocation5 + $0xe60] sm:$0xff]
    %v530 = vld [vmem:[#allocation5 + $0xe68] sm:$0xff]
    %v531 = vld [vmem:[#allocation5 + $0xe70] sm:$0xff]
    %v532 = vld [vmem:[#allocation5 + $0xe78] sm:$0xff]
    %v533 = vld [vmem:[#allocation5 + $0xe80] sm:$0xff]
    %v534 = vld [vmem:[#allocation5 + $0xe88] sm:$0xff]
    %v535 = vld [vmem:[#allocation5 + $0xe90] sm:$0xff]
    %v536 = vld [vmem:[#allocation5 + $0xe98] sm:$0xff]
    %v537 = vld [vmem:[#allocation5 + $0xea0] sm:$0xff]
    %v538 = vld [vmem:[#allocation5 + $0xea8] sm:$0xff]
    %v539 = vld [vmem:[#allocation5 + $0xeb0] sm:$0xff]
    %v540 = vld [vmem:[#allocation5 + $0xeb8] sm:$0xff]
    %v541 = vld [vmem:[#allocation5 + $0xec0] sm:$0xff]
    %v542 = vld [vmem:[#allocation5 + $0xec8] sm:$0xff]
    %v543 = vld [vmem:[#allocation5 + $0xed0] sm:$0xff]
    %v544 = vld [vmem:[#allocation5 + $0xed8] sm:$0xff]
    %v545 = vld [vmem:[#allocation5 + $0xee0] sm:$0xff]
    %v546 = vld [vmem:[#allocation5 + $0xee8] sm:$0xff]
    %v547 = vld [vmem:[#allocation5 + $0xef0] sm:$0xff]
    %v548 = vld [vmem:[#allocation5 + $0xef8] sm:$0xff]
    %v549 = vld [vmem:[#allocation5 + $0xf00] sm:$0xff]
    %v550 = vld [vmem:[#allocation5 + $0xf08] sm:$0xff]
    %v551 = vld [vmem:[#allocation5 + $0xf10] sm:$0xff]
    %v552 = vld [vmem:[#allocation5 + $0xf18] sm:$0xff]
    %v553 = vld [vmem:[#allocation5 + $0xf20] sm:$0xff]
    %v554 = vld [vmem:[#allocation5 + $0xf28] sm:$0xff]
    %v555 = vld [vmem:[#allocation5 + $0xf30] sm:$0xff]
    %v556 = vld [vmem:[#allocation5 + $0xf38] sm:$0xff]
    %v557 = vld [vmem:[#allocation5 + $0xf40] sm:$0xff]
    %v558 = vld [vmem:[#allocation5 + $0xf48] sm:$0xff]
    %v559 = vld [vmem:[#allocation5 + $0xf50] sm:$0xff]
    %v560 = vld [vmem:[#allocation5 + $0xf58] sm:$0xff]
    %v561 = vld [vmem:[#allocation5 + $0xf60] sm:$0xff]
    %v562 = vld [vmem:[#allocation5 + $0xf68] sm:$0xff]
    %v563 = vld [vmem:[#allocation5 + $0xf70] sm:$0xff]
    %v564 = vld [vmem:[#allocation5 + $0xf78] sm:$0xff]
    %v565 = vld [vmem:[#allocation5 + $0xf80] sm:$0xff]
    %v566 = vld [vmem:[#allocation5 + $0xf88] sm:$0xff]
    %v567 = vld [vmem:[#allocation5 + $0xf90] sm:$0xff]
    %v568 = vld [vmem:[#allocation5 + $0xf98] sm:$0xff]
    %v569 = vld [vmem:[#allocation7] sm:$0xff]
    %v571 = vlaneseq
    %v572 = vshrl.u32 %v571, 7
    %v573 = vsub.s32 0, %v572
    %v574 = vrot.slane %v569, %v573
    %v575 = vlaneseq
    %v576 = vshrl.u32 %v575, 7
    %v577 = vsub.s32 1, %v576
    %v578 = vrot.slane %v569, %v577
    %v579 = vlaneseq
    %v580 = vshrl.u32 %v579, 7
    %v581 = vsub.s32 2, %v580
    %v582 = vrot.slane %v569, %v581
    %v583 = vlaneseq
    %v584 = vshrl.u32 %v583, 7
    %v585 = vsub.s32 3, %v584
    %v586 = vrot.slane %v569, %v585
    %v587 = vlaneseq
    %v588 = vshrl.u32 %v587, 7
    %v589 = vsub.s32 4, %v588
    %v590 = vrot.slane %v569, %v589
    %v591 = vlaneseq
    %v592 = vshrl.u32 %v591, 7
    %v593 = vsub.s32 5, %v592
    %v594 = vrot.slane %v569, %v593
    %v595 = vlaneseq
    %v596 = vshrl.u32 %v595, 7
    %v597 = vsub.s32 6, %v596
    %v598 = vrot.slane %v569, %v597
    %v599 = vlaneseq
    %v600 = vshrl.u32 %v599, 7
    %v601 = vsub.s32 7, %v600
    %v602 = vrot.slane %v569, %v601
    %v1111 = vunpack.c.l.b16 %v69
    %v1112 = vunpack.c.h.b16 %v69
    %v1113 = vunpack.c.l.b16 %v70
    %v1114 = vunpack.c.h.b16 %v70
    %v1115 = vunpack.c.l.b16 %v71
    %v1116 = vunpack.c.h.b16 %v71
    %v1117 = vunpack.c.l.b16 %v72
    %v1118 = vunpack.c.h.b16 %v72
    %v1119 = vunpack.c.l.b16 %v73
    %v1120 = vunpack.c.h.b16 %v73
    %v1121 = vunpack.c.l.b16 %v74
    %v1122 = vunpack.c.h.b16 %v74
    %v1123 = vunpack.c.l.b16 %v75
    %v1124 = vunpack.c.h.b16 %v75
    %v1125 = vunpack.c.l.b16 %v76
    %v1126 = vunpack.c.h.b16 %v76
    %v1127 = vunpack.c.l.b16 %v77
    %v1128 = vunpack.c.h.b16 %v77
    %v1129 = vunpack.c.l.b16 %v78
    %v1130 = vunpack.c.h.b16 %v78
    %v1131 = vunpack.c.l.b16 %v79
    %v1132 = vunpack.c.h.b16 %v79
    %v1133 = vunpack.c.l.b16 %v80
    %v1134 = vunpack.c.h.b16 %v80
    %v1135 = vunpack.c.l.b16 %v81
    %v1136 = vunpack.c.h.b16 %v81
    %v1137 = vunpack.c.l.b16 %v82
    %v1138 = vunpack.c.h.b16 %v82
    %v1139 = vunpack.c.l.b16 %v83
    %v1140 = vunpack.c.h.b16 %v83
    %v1141 = vunpack.c.l.b16 %v84
    %v1142 = vunpack.c.h.b16 %v84
    %v1143 = vunpack.c.l.b16 %v85
    %v1144 = vunpack.c.h.b16 %v85
    %v1145 = vunpack.c.l.b16 %v86
    %v1146 = vunpack.c.h.b16 %v86
    %v1147 = vunpack.c.l.b16 %v87
    %v1148 = vunpack.c.h.b16 %v87
    %v1149 = vunpack.c.l.b16 %v88
    %v1150 = vunpack.c.h.b16 %v88
    %v1151 = vunpack.c.l.b16 %v89
    %v1152 = vunpack.c.h.b16 %v89
    %v1153 = vunpack.c.l.b16 %v90
    %v1154 = vunpack.c.h.b16 %v90
    %v1155 = vunpack.c.l.b16 %v91
    %v1156 = vunpack.c.h.b16 %v91
    %v1157 = vunpack.c.l.b16 %v92
    %v1158 = vunpack.c.h.b16 %v92
    %v1159 = vunpack.c.l.b16 %v93
    %v1160 = vunpack.c.h.b16 %v93
    %v1161 = vunpack.c.l.b16 %v94
    %v1162 = vunpack.c.h.b16 %v94
    %v1163 = vunpack.c.l.b16 %v95
    %v1164 = vunpack.c.h.b16 %v95
    %v1165 = vunpack.c.l.b16 %v96
    %v1166 = vunpack.c.h.b16 %v96
    %v1167 = vunpack.c.l.b16 %v97
    %v1168 = vunpack.c.h.b16 %v97
    %v1169 = vunpack.c.l.b16 %v98
    %v1170 = vunpack.c.h.b16 %v98
    %v1171 = vunpack.c.l.b16 %v99
    %v1172 = vunpack.c.h.b16 %v99
    %v1173 = vunpack.c.l.b16 %v100
    %v1174 = vunpack.c.h.b16 %v100
    %v1175 = vunpack.c.l.b16 %v101
    %v1176 = vunpack.c.h.b16 %v101
    %v1177 = vunpack.c.l.b16 %v102
    %v1178 = vunpack.c.h.b16 %v102
    %v1179 = vunpack.c.l.b16 %v103
    %v1180 = vunpack.c.h.b16 %v103
    %v1181 = vunpack.c.l.b16 %v104
    %v1182 = vunpack.c.h.b16 %v104
    %v1183 = vunpack.c.l.b16 %v105
    %v1184 = vunpack.c.h.b16 %v105
    %v1185 = vunpack.c.l.b16 %v106
    %v1186 = vunpack.c.h.b16 %v106
    %v1187 = vunpack.c.l.b16 %v107
    %v1188 = vunpack.c.h.b16 %v107
    %v1189 = vunpack.c.l.b16 %v108
    %v1190 = vunpack.c.h.b16 %v108
    %v1191 = vunpack.c.l.b16 %v109
    %v1192 = vunpack.c.h.b16 %v109
    %v1193 = vunpack.c.l.b16 %v110
    %v1194 = vunpack.c.h.b16 %v110
    %v1195 = vunpack.c.l.b16 %v111
    %v1196 = vunpack.c.h.b16 %v111
    %v1197 = vunpack.c.l.b16 %v112
    %v1198 = vunpack.c.h.b16 %v112
    %v1199 = vunpack.c.l.b16 %v113
    %v1200 = vunpack.c.h.b16 %v113
    %v1201 = vunpack.c.l.b16 %v114
    %v1202 = vunpack.c.h.b16 %v114
    %v1203 = vunpack.c.l.b16 %v115
    %v1204 = vunpack.c.h.b16 %v115
    %v1205 = vunpack.c.l.b16 %v116
    %v1206 = vunpack.c.h.b16 %v116
    %v1207 = vunpack.c.l.b16 %v117
    %v1208 = vunpack.c.h.b16 %v117
    %v1209 = vunpack.c.l.b16 %v118
    %v1210 = vunpack.c.h.b16 %v118
    %v1211 = vunpack.c.l.b16 %v119
    %v1212 = vunpack.c.h.b16 %v119
    %v1213 = vunpack.c.l.b16 %v120
    %v1214 = vunpack.c.h.b16 %v120
    %v1215 = vunpack.c.l.b16 %v121
    %v1216 = vunpack.c.h.b16 %v121
    %v1217 = vunpack.c.l.b16 %v122
    %v1218 = vunpack.c.h.b16 %v122
    %v1219 = vunpack.c.l.b16 %v123
    %v1220 = vunpack.c.h.b16 %v123
    %v1221 = vunpack.c.l.b16 %v124
    %v1222 = vunpack.c.h.b16 %v124
    %v1223 = vunpack.c.l.b16 %v125
    %v1224 = vunpack.c.h.b16 %v125
    %v1225 = vunpack.c.l.b16 %v126
    %v1226 = vunpack.c.h.b16 %v126
    %v1227 = vunpack.c.l.b16 %v127
    %v1228 = vunpack.c.h.b16 %v127
    %v1229 = vunpack.c.l.b16 %v128
    %v1230 = vunpack.c.h.b16 %v128
    %v1231 = vunpack.c.l.b16 %v129
    %v1232 = vunpack.c.h.b16 %v129
    %v1233 = vunpack.c.l.b16 %v130
    %v1234 = vunpack.c.h.b16 %v130
    %v1235 = vunpack.c.l.b16 %v131
    %v1236 = vunpack.c.h.b16 %v131
    %v1237 = vunpack.c.l.b16 %v132
    %v1238 = vunpack.c.h.b16 %v132
    %v1239 = vunpack.c.l.b16 %v133
    %v1240 = vunpack.c.h.b16 %v133
    %v1241 = vunpack.c.l.b16 %v134
    %v1242 = vunpack.c.h.b16 %v134
    %v1243 = vunpack.c.l.b16 %v135
    %v1244 = vunpack.c.h.b16 %v135
    %v1245 = vunpack.c.l.b16 %v136
    %v1246 = vunpack.c.h.b16 %v136
    %v1247 = vunpack.c.l.b16 %v137
    %v1248 = vunpack.c.h.b16 %v137
    %v1249 = vunpack.c.l.b16 %v138
    %v1250 = vunpack.c.h.b16 %v138
    %v1251 = vunpack.c.l.b16 %v139
    %v1252 = vunpack.c.h.b16 %v139
    %v1253 = vunpack.c.l.b16 %v140
    %v1254 = vunpack.c.h.b16 %v140
    %v1255 = vunpack.c.l.b16 %v141
    %v1256 = vunpack.c.h.b16 %v141
    %v1257 = vunpack.c.l.b16 %v142
    %v1258 = vunpack.c.h.b16 %v142
    %v1259 = vunpack.c.l.b16 %v143
    %v1260 = vunpack.c.h.b16 %v143
    %v1261 = vunpack.c.l.b16 %v144
    %v1262 = vunpack.c.h.b16 %v144
    %v1263 = vunpack.c.l.b16 %v145
    %v1264 = vunpack.c.h.b16 %v145
    %v1265 = vunpack.c.l.b16 %v146
    %v1266 = vunpack.c.h.b16 %v146
    %v1267 = vunpack.c.l.b16 %v147
    %v1268 = vunpack.c.h.b16 %v147
    %v1269 = vunpack.c.l.b16 %v148
    %v1270 = vunpack.c.h.b16 %v148
    %v1271 = vunpack.c.l.b16 %v149
    %v1272 = vunpack.c.h.b16 %v149
    %v1273 = vunpack.c.l.b16 %v150
    %v1274 = vunpack.c.h.b16 %v150
    %v1275 = vunpack.c.l.b16 %v151
    %v1276 = vunpack.c.h.b16 %v151
    %v1277 = vunpack.c.l.b16 %v152
    %v1278 = vunpack.c.h.b16 %v152
    %v1279 = vunpack.c.l.b16 %v153
    %v1280 = vunpack.c.h.b16 %v153
    %v1281 = vunpack.c.l.b16 %v154
    %v1282 = vunpack.c.h.b16 %v154
    %v1283 = vunpack.c.l.b16 %v155
    %v1284 = vunpack.c.h.b16 %v155
    %v1285 = vunpack.c.l.b16 %v156
    %v1286 = vunpack.c.h.b16 %v156
    %v1287 = vunpack.c.l.b16 %v157
    %v1288 = vunpack.c.h.b16 %v157
    %v1289 = vunpack.c.l.b16 %v158
    %v1290 = vunpack.c.h.b16 %v158
    %v1291 = vunpack.c.l.b16 %v159
    %v1292 = vunpack.c.h.b16 %v159
    %v1293 = vunpack.c.l.b16 %v160
    %v1294 = vunpack.c.h.b16 %v160
    %v1295 = vunpack.c.l.b16 %v161
    %v1296 = vunpack.c.h.b16 %v161
    %v1297 = vunpack.c.l.b16 %v162
    %v1298 = vunpack.c.h.b16 %v162
    %v1299 = vunpack.c.l.b16 %v163
    %v1300 = vunpack.c.h.b16 %v163
    %v1301 = vunpack.c.l.b16 %v164
    %v1302 = vunpack.c.h.b16 %v164
    %v1303 = vunpack.c.l.b16 %v165
    %v1304 = vunpack.c.h.b16 %v165
    %v1305 = vunpack.c.l.b16 %v166
    %v1306 = vunpack.c.h.b16 %v166
    %v1307 = vunpack.c.l.b16 %v167
    %v1308 = vunpack.c.h.b16 %v167
    %v1309 = vunpack.c.l.b16 %v168
    %v1310 = vunpack.c.h.b16 %v168
    %v1311 = vunpack.c.l.b16 %v169
    %v1312 = vunpack.c.h.b16 %v169
    %v1313 = vunpack.c.l.b16 %v170
    %v1314 = vunpack.c.h.b16 %v170
    %v1315 = vunpack.c.l.b16 %v171
    %v1316 = vunpack.c.h.b16 %v171
    %v1317 = vunpack.c.l.b16 %v172
    %v1318 = vunpack.c.h.b16 %v172
    %v1319 = vunpack.c.l.b16 %v173
    %v1320 = vunpack.c.h.b16 %v173
    %v1321 = vunpack.c.l.b16 %v174
    %v1322 = vunpack.c.h.b16 %v174
    %v1323 = vunpack.c.l.b16 %v175
    %v1324 = vunpack.c.h.b16 %v175
    %v1325 = vunpack.c.l.b16 %v176
    %v1326 = vunpack.c.h.b16 %v176
    %v1327 = vunpack.c.l.b16 %v177
    %v1328 = vunpack.c.h.b16 %v177
    %v1329 = vunpack.c.l.b16 %v178
    %v1330 = vunpack.c.h.b16 %v178
    %v1331 = vunpack.c.l.b16 %v179
    %v1332 = vunpack.c.h.b16 %v179
    %v1333 = vunpack.c.l.b16 %v180
    %v1334 = vunpack.c.h.b16 %v180
    %v1335 = vunpack.c.l.b16 %v181
    %v1336 = vunpack.c.h.b16 %v181
    %v1337 = vunpack.c.l.b16 %v182
    %v1338 = vunpack.c.h.b16 %v182
    %v1339 = vunpack.c.l.b16 %v183
    %v1340 = vunpack.c.h.b16 %v183
    %v1341 = vunpack.c.l.b16 %v184
    %v1342 = vunpack.c.h.b16 %v184
    %v1343 = vunpack.c.l.b16 %v185
    %v1344 = vunpack.c.h.b16 %v185
    %v1345 = vunpack.c.l.b16 %v186
    %v1346 = vunpack.c.h.b16 %v186
    %v1347 = vunpack.c.l.b16 %v187
    %v1348 = vunpack.c.h.b16 %v187
    %v1349 = vunpack.c.l.b16 %v188
    %v1350 = vunpack.c.h.b16 %v188
    %v1351 = vunpack.c.l.b16 %v189
    %v1352 = vunpack.c.h.b16 %v189
    %v1353 = vunpack.c.l.b16 %v190
    %v1354 = vunpack.c.h.b16 %v190
    %v1355 = vunpack.c.l.b16 %v191
    %v1356 = vunpack.c.h.b16 %v191
    %v1357 = vunpack.c.l.b16 %v192
    %v1358 = vunpack.c.h.b16 %v192
    %v1359 = vunpack.c.l.b16 %v193
    %v1360 = vunpack.c.h.b16 %v193
    %v1361 = vunpack.c.l.b16 %v194
    %v1362 = vunpack.c.h.b16 %v194
    %v1363 = vunpack.c.l.b16 %v195
    %v1364 = vunpack.c.h.b16 %v195
    %v1365 = vunpack.c.l.b16 %v196
    %v1366 = vunpack.c.h.b16 %v196
    %v1367 = vunpack.c.l.b16 %v197
    %v1368 = vunpack.c.h.b16 %v197
    %v1369 = vunpack.c.l.b16 %v198
    %v1370 = vunpack.c.h.b16 %v198
    %v1371 = vunpack.c.l.b16 %v199
    %v1372 = vunpack.c.h.b16 %v199
    %v1373 = vunpack.c.l.b16 %v200
    %v1374 = vunpack.c.h.b16 %v200
    %v1375 = vunpack.c.l.b16 %v201
    %v1376 = vunpack.c.h.b16 %v201
    %v1377 = vunpack.c.l.b16 %v202
    %v1378 = vunpack.c.h.b16 %v202
    %v1379 = vunpack.c.l.b16 %v203
    %v1380 = vunpack.c.h.b16 %v203
    %v1381 = vunpack.c.l.b16 %v204
    %v1382 = vunpack.c.h.b16 %v204
    %v1383 = vunpack.c.l.b16 %v205
    %v1384 = vunpack.c.h.b16 %v205
    %v1385 = vunpack.c.l.b16 %v206
    %v1386 = vunpack.c.h.b16 %v206
    %v1387 = vunpack.c.l.b16 %v207
    %v1388 = vunpack.c.h.b16 %v207
    %v1389 = vunpack.c.l.b16 %v208
    %v1390 = vunpack.c.h.b16 %v208
    %v1391 = vunpack.c.l.b16 %v209
    %v1392 = vunpack.c.h.b16 %v209
    %v1393 = vunpack.c.l.b16 %v210
    %v1394 = vunpack.c.h.b16 %v210
    %v1395 = vunpack.c.l.b16 %v211
    %v1396 = vunpack.c.h.b16 %v211
    %v1397 = vunpack.c.l.b16 %v212
    %v1398 = vunpack.c.h.b16 %v212
    %v1399 = vunpack.c.l.b16 %v213
    %v1400 = vunpack.c.h.b16 %v213
    %v1401 = vunpack.c.l.b16 %v214
    %v1402 = vunpack.c.h.b16 %v214
    %v1403 = vunpack.c.l.b16 %v215
    %v1404 = vunpack.c.h.b16 %v215
    %v1405 = vunpack.c.l.b16 %v216
    %v1406 = vunpack.c.h.b16 %v216
    %v1407 = vunpack.c.l.b16 %v217
    %v1408 = vunpack.c.h.b16 %v217
    %v1409 = vunpack.c.l.b16 %v218
    %v1410 = vunpack.c.h.b16 %v218
    %v1411 = vunpack.c.l.b16 %v219
    %v1412 = vunpack.c.h.b16 %v219
    %v1413 = vunpack.c.l.b16 %v220
    %v1414 = vunpack.c.h.b16 %v220
    %v1415 = vunpack.c.l.b16 %v221
    %v1416 = vunpack.c.h.b16 %v221
    %v1417 = vunpack.c.l.b16 %v222
    %v1418 = vunpack.c.h.b16 %v222
    %v1419 = vunpack.c.l.b16 %v223
    %v1420 = vunpack.c.h.b16 %v223
    %v1421 = vunpack.c.l.b16 %v224
    %v1422 = vunpack.c.h.b16 %v224
    %v1423 = vunpack.c.l.b16 %v225
    %v1424 = vunpack.c.h.b16 %v225
    %v1425 = vunpack.c.l.b16 %v226
    %v1426 = vunpack.c.h.b16 %v226
    %v1427 = vunpack.c.l.b16 %v227
    %v1428 = vunpack.c.h.b16 %v227
    %v1429 = vunpack.c.l.b16 %v228
    %v1430 = vunpack.c.h.b16 %v228
    %v1431 = vunpack.c.l.b16 %v229
    %v1432 = vunpack.c.h.b16 %v229
    %v1433 = vunpack.c.l.b16 %v230
    %v1434 = vunpack.c.h.b16 %v230
    %v1435 = vunpack.c.l.b16 %v231
    %v1436 = vunpack.c.h.b16 %v231
    %v1437 = vunpack.c.l.b16 %v232
    %v1438 = vunpack.c.h.b16 %v232
    %v1439 = vunpack.c.l.b16 %v233
    %v1440 = vunpack.c.h.b16 %v233
    %v1441 = vunpack.c.l.b16 %v234
    %v1442 = vunpack.c.h.b16 %v234
    %v1443 = vunpack.c.l.b16 %v235
    %v1444 = vunpack.c.h.b16 %v235
    %v1445 = vunpack.c.l.b16 %v236
    %v1446 = vunpack.c.h.b16 %v236
    %v1447 = vunpack.c.l.b16 %v237
    %v1448 = vunpack.c.h.b16 %v237
    %v1449 = vunpack.c.l.b16 %v238
    %v1450 = vunpack.c.h.b16 %v238
    %v1451 = vunpack.c.l.b16 %v239
    %v1452 = vunpack.c.h.b16 %v239
    %v1453 = vunpack.c.l.b16 %v240
    %v1454 = vunpack.c.h.b16 %v240
    %v1455 = vunpack.c.l.b16 %v241
    %v1456 = vunpack.c.h.b16 %v241
    %v1457 = vunpack.c.l.b16 %v242
    %v1458 = vunpack.c.h.b16 %v242
    %v1459 = vunpack.c.l.b16 %v243
    %v1460 = vunpack.c.h.b16 %v243
    %v1461 = vunpack.c.l.b16 %v244
    %v1462 = vunpack.c.h.b16 %v244
    %v1463 = vunpack.c.l.b16 %v245
    %v1464 = vunpack.c.h.b16 %v245
    %v1465 = vunpack.c.l.b16 %v246
    %v1466 = vunpack.c.h.b16 %v246
    %v1467 = vunpack.c.l.b16 %v247
    %v1468 = vunpack.c.h.b16 %v247
    %v1469 = vunpack.c.l.b16 %v248
    %v1470 = vunpack.c.h.b16 %v248
    %v1471 = vunpack.c.l.b16 %v249
    %v1472 = vunpack.c.h.b16 %v249
    %v1473 = vunpack.c.l.b16 %v250
    %v1474 = vunpack.c.h.b16 %v250
    %v1475 = vunpack.c.l.b16 %v251
    %v1476 = vunpack.c.h.b16 %v251
    %v1477 = vunpack.c.l.b16 %v252
    %v1478 = vunpack.c.h.b16 %v252
    %v1479 = vunpack.c.l.b16 %v253
    %v1480 = vunpack.c.h.b16 %v253
    %v1481 = vunpack.c.l.b16 %v254
    %v1482 = vunpack.c.h.b16 %v254
    %v1483 = vunpack.c.l.b16 %v255
    %v1484 = vunpack.c.h.b16 %v255
    %v1485 = vunpack.c.l.b16 %v256
    %v1486 = vunpack.c.h.b16 %v256
    %v1487 = vunpack.c.l.b16 %v257
    %v1488 = vunpack.c.h.b16 %v257
    %v1489 = vunpack.c.l.b16 %v258
    %v1490 = vunpack.c.h.b16 %v258
    %v1491 = vunpack.c.l.b16 %v259
    %v1492 = vunpack.c.h.b16 %v259
    %v1493 = vunpack.c.l.b16 %v260
    %v1494 = vunpack.c.h.b16 %v260
    %v1495 = vunpack.c.l.b16 %v261
    %v1496 = vunpack.c.h.b16 %v261
    %v1497 = vunpack.c.l.b16 %v262
    %v1498 = vunpack.c.h.b16 %v262
    %v1499 = vunpack.c.l.b16 %v263
    %v1500 = vunpack.c.h.b16 %v263
    %v1501 = vunpack.c.l.b16 %v264
    %v1502 = vunpack.c.h.b16 %v264
    %v1503 = vunpack.c.l.b16 %v265
    %v1504 = vunpack.c.h.b16 %v265
    %v1505 = vunpack.c.l.b16 %v266
    %v1506 = vunpack.c.h.b16 %v266
    %v1507 = vunpack.c.l.b16 %v267
    %v1508 = vunpack.c.h.b16 %v267
    %v1509 = vunpack.c.l.b16 %v268
    %v1510 = vunpack.c.h.b16 %v268
    %v1511 = vunpack.c.l.b16 %v269
    %v1512 = vunpack.c.h.b16 %v269
    %v1513 = vunpack.c.l.b16 %v270
    %v1514 = vunpack.c.h.b16 %v270
    %v1515 = vunpack.c.l.b16 %v271
    %v1516 = vunpack.c.h.b16 %v271
    %v1517 = vunpack.c.l.b16 %v272
    %v1518 = vunpack.c.h.b16 %v272
    %v1519 = vunpack.c.l.b16 %v273
    %v1520 = vunpack.c.h.b16 %v273
    %v1521 = vunpack.c.l.b16 %v274
    %v1522 = vunpack.c.h.b16 %v274
    %v1523 = vunpack.c.l.b16 %v275
    %v1524 = vunpack.c.h.b16 %v275
    %v1525 = vunpack.c.l.b16 %v276
    %v1526 = vunpack.c.h.b16 %v276
    %v1527 = vunpack.c.l.b16 %v277
    %v1528 = vunpack.c.h.b16 %v277
    %v1529 = vunpack.c.l.b16 %v278
    %v1530 = vunpack.c.h.b16 %v278
    %v1531 = vunpack.c.l.b16 %v279
    %v1532 = vunpack.c.h.b16 %v279
    %v1533 = vunpack.c.l.b16 %v280
    %v1534 = vunpack.c.h.b16 %v280
    %v1535 = vunpack.c.l.b16 %v281
    %v1536 = vunpack.c.h.b16 %v281
    %v1537 = vunpack.c.l.b16 %v282
    %v1538 = vunpack.c.h.b16 %v282
    %v1539 = vunpack.c.l.b16 %v283
    %v1540 = vunpack.c.h.b16 %v283
    %v1541 = vunpack.c.l.b16 %v284
    %v1542 = vunpack.c.h.b16 %v284
    %v1543 = vunpack.c.l.b16 %v285
    %v1544 = vunpack.c.h.b16 %v285
    %v1545 = vunpack.c.l.b16 %v286
    %v1546 = vunpack.c.h.b16 %v286
    %v1547 = vunpack.c.l.b16 %v287
    %v1548 = vunpack.c.h.b16 %v287
    %v1549 = vunpack.c.l.b16 %v288
    %v1550 = vunpack.c.h.b16 %v288
    %v1551 = vunpack.c.l.b16 %v289
    %v1552 = vunpack.c.h.b16 %v289
    %v1553 = vunpack.c.l.b16 %v290
    %v1554 = vunpack.c.h.b16 %v290
    %v1555 = vunpack.c.l.b16 %v291
    %v1556 = vunpack.c.h.b16 %v291
    %v1557 = vunpack.c.l.b16 %v292
    %v1558 = vunpack.c.h.b16 %v292
    %v1559 = vunpack.c.l.b16 %v293
    %v1560 = vunpack.c.h.b16 %v293
    %v1561 = vunpack.c.l.b16 %v294
    %v1562 = vunpack.c.h.b16 %v294
    %v1563 = vunpack.c.l.b16 %v295
    %v1564 = vunpack.c.h.b16 %v295
    %v1565 = vunpack.c.l.b16 %v296
    %v1566 = vunpack.c.h.b16 %v296
    %v1567 = vunpack.c.l.b16 %v297
    %v1568 = vunpack.c.h.b16 %v297
    %v1569 = vunpack.c.l.b16 %v298
    %v1570 = vunpack.c.h.b16 %v298
    %v1571 = vunpack.c.l.b16 %v299
    %v1572 = vunpack.c.h.b16 %v299
    %v1573 = vunpack.c.l.b16 %v300
    %v1574 = vunpack.c.h.b16 %v300
    %v1575 = vunpack.c.l.b16 %v301
    %v1576 = vunpack.c.h.b16 %v301
    %v1577 = vunpack.c.l.b16 %v302
    %v1578 = vunpack.c.h.b16 %v302
    %v1579 = vunpack.c.l.b16 %v303
    %v1580 = vunpack.c.h.b16 %v303
    %v1581 = vunpack.c.l.b16 %v304
    %v1582 = vunpack.c.h.b16 %v304
    %v1583 = vunpack.c.l.b16 %v305
    %v1584 = vunpack.c.h.b16 %v305
    %v1585 = vunpack.c.l.b16 %v306
    %v1586 = vunpack.c.h.b16 %v306
    %v1587 = vunpack.c.l.b16 %v307
    %v1588 = vunpack.c.h.b16 %v307
    %v1589 = vunpack.c.l.b16 %v308
    %v1590 = vunpack.c.h.b16 %v308
    %v1591 = vunpack.c.l.b16 %v309
    %v1592 = vunpack.c.h.b16 %v309
    %v1593 = vunpack.c.l.b16 %v310
    %v1594 = vunpack.c.h.b16 %v310
    %v1595 = vunpack.c.l.b16 %v311
    %v1596 = vunpack.c.h.b16 %v311
    %v1597 = vunpack.c.l.b16 %v312
    %v1598 = vunpack.c.h.b16 %v312
    %v1599 = vunpack.c.l.b16 %v313
    %v1600 = vunpack.c.h.b16 %v313
    %v1601 = vunpack.c.l.b16 %v314
    %v1602 = vunpack.c.h.b16 %v314
    %v1603 = vunpack.c.l.b16 %v315
    %v1604 = vunpack.c.h.b16 %v315
    %v1605 = vunpack.c.l.b16 %v316
    %v1606 = vunpack.c.h.b16 %v316
    %v1607 = vunpack.c.l.b16 %v317
    %v1608 = vunpack.c.h.b16 %v317
    %v1609 = vunpack.c.l.b16 %v318
    %v1610 = vunpack.c.h.b16 %v318
    %v1611 = vunpack.c.l.b16 %v319
    %v1612 = vunpack.c.h.b16 %v319
    %v1613 = vunpack.c.l.b16 %v320
    %v1614 = vunpack.c.h.b16 %v320
    %v1615 = vunpack.c.l.b16 %v321
    %v1616 = vunpack.c.h.b16 %v321
    %v1617 = vunpack.c.l.b16 %v322
    %v1618 = vunpack.c.h.b16 %v322
    %v1619 = vunpack.c.l.b16 %v323
    %v1620 = vunpack.c.h.b16 %v323
    %v1621 = vunpack.c.l.b16 %v324
    %v1622 = vunpack.c.h.b16 %v324
    %v1623 = vunpack.c.l.b16 %v325
    %v1624 = vunpack.c.h.b16 %v325
    %v1625 = vunpack.c.l.b16 %v326
    %v1626 = vunpack.c.h.b16 %v326
    %v1627 = vunpack.c.l.b16 %v327
    %v1628 = vunpack.c.h.b16 %v327
    %v1629 = vunpack.c.l.b16 %v328
    %v1630 = vunpack.c.h.b16 %v328
    %v1631 = vunpack.c.l.b16 %v329
    %v1632 = vunpack.c.h.b16 %v329
    %v1633 = vunpack.c.l.b16 %v330
    %v1634 = vunpack.c.h.b16 %v330
    %v1635 = vunpack.c.l.b16 %v331
    %v1636 = vunpack.c.h.b16 %v331
    %v1637 = vunpack.c.l.b16 %v332
    %v1638 = vunpack.c.h.b16 %v332
    %v1639 = vunpack.c.l.b16 %v333
    %v1640 = vunpack.c.h.b16 %v333
    %v1641 = vunpack.c.l.b16 %v334
    %v1642 = vunpack.c.h.b16 %v334
    %v1643 = vunpack.c.l.b16 %v335
    %v1644 = vunpack.c.h.b16 %v335
    %v1645 = vunpack.c.l.b16 %v336
    %v1646 = vunpack.c.h.b16 %v336
    %v1647 = vunpack.c.l.b16 %v337
    %v1648 = vunpack.c.h.b16 %v337
    %v1649 = vunpack.c.l.b16 %v338
    %v1650 = vunpack.c.h.b16 %v338
    %v1651 = vunpack.c.l.b16 %v339
    %v1652 = vunpack.c.h.b16 %v339
    %v1653 = vunpack.c.l.b16 %v340
    %v1654 = vunpack.c.h.b16 %v340
    %v1655 = vunpack.c.l.b16 %v341
    %v1656 = vunpack.c.h.b16 %v341
    %v1657 = vunpack.c.l.b16 %v342
    %v1658 = vunpack.c.h.b16 %v342
    %v1659 = vunpack.c.l.b16 %v343
    %v1660 = vunpack.c.h.b16 %v343
    %v1661 = vunpack.c.l.b16 %v344
    %v1662 = vunpack.c.h.b16 %v344
    %v1663 = vunpack.c.l.b16 %v345
    %v1664 = vunpack.c.h.b16 %v345
    %v1665 = vunpack.c.l.b16 %v346
    %v1666 = vunpack.c.h.b16 %v346
    %v1667 = vunpack.c.l.b16 %v347
    %v1668 = vunpack.c.h.b16 %v347
    %v1669 = vunpack.c.l.b16 %v348
    %v1670 = vunpack.c.h.b16 %v348
    %v1671 = vunpack.c.l.b16 %v349
    %v1672 = vunpack.c.h.b16 %v349
    %v1673 = vunpack.c.l.b16 %v350
    %v1674 = vunpack.c.h.b16 %v350
    %v1675 = vunpack.c.l.b16 %v351
    %v1676 = vunpack.c.h.b16 %v351
    %v1677 = vunpack.c.l.b16 %v352
    %v1678 = vunpack.c.h.b16 %v352
    %v1679 = vunpack.c.l.b16 %v353
    %v1680 = vunpack.c.h.b16 %v353
    %v1681 = vunpack.c.l.b16 %v354
    %v1682 = vunpack.c.h.b16 %v354
    %v1683 = vunpack.c.l.b16 %v355
    %v1684 = vunpack.c.h.b16 %v355
    %v1685 = vunpack.c.l.b16 %v356
    %v1686 = vunpack.c.h.b16 %v356
    %v1687 = vunpack.c.l.b16 %v357
    %v1688 = vunpack.c.h.b16 %v357
    %v1689 = vunpack.c.l.b16 %v358
    %v1690 = vunpack.c.h.b16 %v358
    %v1691 = vunpack.c.l.b16 %v359
    %v1692 = vunpack.c.h.b16 %v359
    %v1693 = vunpack.c.l.b16 %v360
    %v1694 = vunpack.c.h.b16 %v360
    %v1695 = vunpack.c.l.b16 %v361
    %v1696 = vunpack.c.h.b16 %v361
    %v1697 = vunpack.c.l.b16 %v362
    %v1698 = vunpack.c.h.b16 %v362
    %v1699 = vunpack.c.l.b16 %v363
    %v1700 = vunpack.c.h.b16 %v363
    %v1701 = vunpack.c.l.b16 %v364
    %v1702 = vunpack.c.h.b16 %v364
    %v1703 = vunpack.c.l.b16 %v365
    %v1704 = vunpack.c.h.b16 %v365
    %v1705 = vunpack.c.l.b16 %v366
    %v1706 = vunpack.c.h.b16 %v366
    %v1707 = vunpack.c.l.b16 %v367
    %v1708 = vunpack.c.h.b16 %v367
    %v1709 = vunpack.c.l.b16 %v368
    %v1710 = vunpack.c.h.b16 %v368
    %v1711 = vunpack.c.l.b16 %v369
    %v1712 = vunpack.c.h.b16 %v369
    %v1713 = vunpack.c.l.b16 %v370
    %v1714 = vunpack.c.h.b16 %v370
    %v1715 = vunpack.c.l.b16 %v371
    %v1716 = vunpack.c.h.b16 %v371
    %v1717 = vunpack.c.l.b16 %v372
    %v1718 = vunpack.c.h.b16 %v372
    %v1719 = vunpack.c.l.b16 %v373
    %v1720 = vunpack.c.h.b16 %v373
    %v1721 = vunpack.c.l.b16 %v374
    %v1722 = vunpack.c.h.b16 %v374
    %v1723 = vunpack.c.l.b16 %v375
    %v1724 = vunpack.c.h.b16 %v375
    %v1725 = vunpack.c.l.b16 %v376
    %v1726 = vunpack.c.h.b16 %v376
    %v1727 = vunpack.c.l.b16 %v377
    %v1728 = vunpack.c.h.b16 %v377
    %v1729 = vunpack.c.l.b16 %v378
    %v1730 = vunpack.c.h.b16 %v378
    %v1731 = vunpack.c.l.b16 %v379
    %v1732 = vunpack.c.h.b16 %v379
    %v1733 = vunpack.c.l.b16 %v380
    %v1734 = vunpack.c.h.b16 %v380
    %v1735 = vunpack.c.l.b16 %v381
    %v1736 = vunpack.c.h.b16 %v381
    %v1737 = vunpack.c.l.b16 %v382
    %v1738 = vunpack.c.h.b16 %v382
    %v1739 = vunpack.c.l.b16 %v383
    %v1740 = vunpack.c.h.b16 %v383
    %v1741 = vunpack.c.l.b16 %v384
    %v1742 = vunpack.c.h.b16 %v384
    %v1743 = vunpack.c.l.b16 %v385
    %v1744 = vunpack.c.h.b16 %v385
    %v1745 = vunpack.c.l.b16 %v386
    %v1746 = vunpack.c.h.b16 %v386
    %v1747 = vunpack.c.l.b16 %v387
    %v1748 = vunpack.c.h.b16 %v387
    %v1749 = vunpack.c.l.b16 %v388
    %v1750 = vunpack.c.h.b16 %v388
    %v1751 = vunpack.c.l.b16 %v389
    %v1752 = vunpack.c.h.b16 %v389
    %v1753 = vunpack.c.l.b16 %v390
    %v1754 = vunpack.c.h.b16 %v390
    %v1755 = vunpack.c.l.b16 %v391
    %v1756 = vunpack.c.h.b16 %v391
    %v1757 = vunpack.c.l.b16 %v392
    %v1758 = vunpack.c.h.b16 %v392
    %v1759 = vunpack.c.l.b16 %v393
    %v1760 = vunpack.c.h.b16 %v393
    %v1761 = vunpack.c.l.b16 %v394
    %v1762 = vunpack.c.h.b16 %v394
    %v1763 = vunpack.c.l.b16 %v395
    %v1764 = vunpack.c.h.b16 %v395
    %v1765 = vunpack.c.l.b16 %v396
    %v1766 = vunpack.c.h.b16 %v396
    %v1767 = vunpack.c.l.b16 %v397
    %v1768 = vunpack.c.h.b16 %v397
    %v1769 = vunpack.c.l.b16 %v398
    %v1770 = vunpack.c.h.b16 %v398
    %v1771 = vunpack.c.l.b16 %v399
    %v1772 = vunpack.c.h.b16 %v399
    %v1773 = vunpack.c.l.b16 %v400
    %v1774 = vunpack.c.h.b16 %v400
    %v1775 = vunpack.c.l.b16 %v401
    %v1776 = vunpack.c.h.b16 %v401
    %v1777 = vunpack.c.l.b16 %v402
    %v1778 = vunpack.c.h.b16 %v402
    %v1779 = vunpack.c.l.b16 %v403
    %v1780 = vunpack.c.h.b16 %v403
    %v1781 = vunpack.c.l.b16 %v404
    %v1782 = vunpack.c.h.b16 %v404
    %v1783 = vunpack.c.l.b16 %v405
    %v1784 = vunpack.c.h.b16 %v405
    %v1785 = vunpack.c.l.b16 %v406
    %v1786 = vunpack.c.h.b16 %v406
    %v1787 = vunpack.c.l.b16 %v407
    %v1788 = vunpack.c.h.b16 %v407
    %v1789 = vunpack.c.l.b16 %v408
    %v1790 = vunpack.c.h.b16 %v408
    %v1791 = vunpack.c.l.b16 %v409
    %v1792 = vunpack.c.h.b16 %v409
    %v1793 = vunpack.c.l.b16 %v410
    %v1794 = vunpack.c.h.b16 %v410
    %v1795 = vunpack.c.l.b16 %v411
    %v1796 = vunpack.c.h.b16 %v411
    %v1797 = vunpack.c.l.b16 %v412
    %v1798 = vunpack.c.h.b16 %v412
    %v1799 = vunpack.c.l.b16 %v413
    %v1800 = vunpack.c.h.b16 %v413
    %v1801 = vunpack.c.l.b16 %v414
    %v1802 = vunpack.c.h.b16 %v414
    %v1803 = vunpack.c.l.b16 %v415
    %v1804 = vunpack.c.h.b16 %v415
    %v1805 = vunpack.c.l.b16 %v416
    %v1806 = vunpack.c.h.b16 %v416
    %v1807 = vunpack.c.l.b16 %v417
    %v1808 = vunpack.c.h.b16 %v417
    %v1809 = vunpack.c.l.b16 %v418
    %v1810 = vunpack.c.h.b16 %v418
    %v1811 = vunpack.c.l.b16 %v419
    %v1812 = vunpack.c.h.b16 %v419
    %v1813 = vunpack.c.l.b16 %v420
    %v1814 = vunpack.c.h.b16 %v420
    %v1815 = vunpack.c.l.b16 %v421
    %v1816 = vunpack.c.h.b16 %v421
    %v1817 = vunpack.c.l.b16 %v422
    %v1818 = vunpack.c.h.b16 %v422
    %v1819 = vunpack.c.l.b16 %v423
    %v1820 = vunpack.c.h.b16 %v423
    %v1821 = vunpack.c.l.b16 %v424
    %v1822 = vunpack.c.h.b16 %v424
    %v1823 = vunpack.c.l.b16 %v425
    %v1824 = vunpack.c.h.b16 %v425
    %v1825 = vunpack.c.l.b16 %v426
    %v1826 = vunpack.c.h.b16 %v426
    %v1827 = vunpack.c.l.b16 %v427
    %v1828 = vunpack.c.h.b16 %v427
    %v1829 = vunpack.c.l.b16 %v428
    %v1830 = vunpack.c.h.b16 %v428
    %v1831 = vunpack.c.l.b16 %v429
    %v1832 = vunpack.c.h.b16 %v429
    %v1833 = vunpack.c.l.b16 %v430
    %v1834 = vunpack.c.h.b16 %v430
    %v1835 = vunpack.c.l.b16 %v431
    %v1836 = vunpack.c.h.b16 %v431
    %v1837 = vunpack.c.l.b16 %v432
    %v1838 = vunpack.c.h.b16 %v432
    %v1839 = vunpack.c.l.b16 %v433
    %v1840 = vunpack.c.h.b16 %v433
    %v1841 = vunpack.c.l.b16 %v434
    %v1842 = vunpack.c.h.b16 %v434
    %v1843 = vunpack.c.l.b16 %v435
    %v1844 = vunpack.c.h.b16 %v435
    %v1845 = vunpack.c.l.b16 %v436
    %v1846 = vunpack.c.h.b16 %v436
    %v1847 = vunpack.c.l.b16 %v437
    %v1848 = vunpack.c.h.b16 %v437
    %v1849 = vunpack.c.l.b16 %v438
    %v1850 = vunpack.c.h.b16 %v438
    %v1851 = vunpack.c.l.b16 %v439
    %v1852 = vunpack.c.h.b16 %v439
    %v1853 = vunpack.c.l.b16 %v440
    %v1854 = vunpack.c.h.b16 %v440
    %v1855 = vunpack.c.l.b16 %v441
    %v1856 = vunpack.c.h.b16 %v441
    %v1857 = vunpack.c.l.b16 %v442
    %v1858 = vunpack.c.h.b16 %v442
    %v1859 = vunpack.c.l.b16 %v443
    %v1860 = vunpack.c.h.b16 %v443
    %v1861 = vunpack.c.l.b16 %v444
    %v1862 = vunpack.c.h.b16 %v444
    %v1863 = vunpack.c.l.b16 %v445
    %v1864 = vunpack.c.h.b16 %v445
    %v1865 = vunpack.c.l.b16 %v446
    %v1866 = vunpack.c.h.b16 %v446
    %v1867 = vunpack.c.l.b16 %v447
    %v1868 = vunpack.c.h.b16 %v447
    %v1869 = vunpack.c.l.b16 %v448
    %v1870 = vunpack.c.h.b16 %v448
    %v1871 = vunpack.c.l.b16 %v449
    %v1872 = vunpack.c.h.b16 %v449
    %v1873 = vunpack.c.l.b16 %v450
    %v1874 = vunpack.c.h.b16 %v450
    %v1875 = vunpack.c.l.b16 %v451
    %v1876 = vunpack.c.h.b16 %v451
    %v1877 = vunpack.c.l.b16 %v452
    %v1878 = vunpack.c.h.b16 %v452
    %v1879 = vunpack.c.l.b16 %v453
    %v1880 = vunpack.c.h.b16 %v453
    %v1881 = vunpack.c.l.b16 %v454
    %v1882 = vunpack.c.h.b16 %v454
    %v1883 = vunpack.c.l.b16 %v455
    %v1884 = vunpack.c.h.b16 %v455
    %v1885 = vunpack.c.l.b16 %v456
    %v1886 = vunpack.c.h.b16 %v456
    %v1887 = vunpack.c.l.b16 %v457
    %v1888 = vunpack.c.h.b16 %v457
    %v1889 = vunpack.c.l.b16 %v458
    %v1890 = vunpack.c.h.b16 %v458
    %v1891 = vunpack.c.l.b16 %v459
    %v1892 = vunpack.c.h.b16 %v459
    %v1893 = vunpack.c.l.b16 %v460
    %v1894 = vunpack.c.h.b16 %v460
    %v1895 = vunpack.c.l.b16 %v461
    %v1896 = vunpack.c.h.b16 %v461
    %v1897 = vunpack.c.l.b16 %v462
    %v1898 = vunpack.c.h.b16 %v462
    %v1899 = vunpack.c.l.b16 %v463
    %v1900 = vunpack.c.h.b16 %v463
    %v1901 = vunpack.c.l.b16 %v464
    %v1902 = vunpack.c.h.b16 %v464
    %v1903 = vunpack.c.l.b16 %v465
    %v1904 = vunpack.c.h.b16 %v465
    %v1905 = vunpack.c.l.b16 %v466
    %v1906 = vunpack.c.h.b16 %v466
    %v1907 = vunpack.c.l.b16 %v467
    %v1908 = vunpack.c.h.b16 %v467
    %v1909 = vunpack.c.l.b16 %v468
    %v1910 = vunpack.c.h.b16 %v468
    %v1911 = vunpack.c.l.b16 %v469
    %v1912 = vunpack.c.h.b16 %v469
    %v1913 = vunpack.c.l.b16 %v470
    %v1914 = vunpack.c.h.b16 %v470
    %v1915 = vunpack.c.l.b16 %v471
    %v1916 = vunpack.c.h.b16 %v471
    %v1917 = vunpack.c.l.b16 %v472
    %v1918 = vunpack.c.h.b16 %v472
    %v1919 = vunpack.c.l.b16 %v473
    %v1920 = vunpack.c.h.b16 %v473
    %v1921 = vunpack.c.l.b16 %v474
    %v1922 = vunpack.c.h.b16 %v474
    %v1923 = vunpack.c.l.b16 %v475
    %v1924 = vunpack.c.h.b16 %v475
    %v1925 = vunpack.c.l.b16 %v476
    %v1926 = vunpack.c.h.b16 %v476
    %v1927 = vunpack.c.l.b16 %v477
    %v1928 = vunpack.c.h.b16 %v477
    %v1929 = vunpack.c.l.b16 %v478
    %v1930 = vunpack.c.h.b16 %v478
    %v1931 = vunpack.c.l.b16 %v479
    %v1932 = vunpack.c.h.b16 %v479
    %v1933 = vunpack.c.l.b16 %v480
    %v1934 = vunpack.c.h.b16 %v480
    %v1935 = vunpack.c.l.b16 %v481
    %v1936 = vunpack.c.h.b16 %v481
    %v1937 = vunpack.c.l.b16 %v482
    %v1938 = vunpack.c.h.b16 %v482
    %v1939 = vunpack.c.l.b16 %v483
    %v1940 = vunpack.c.h.b16 %v483
    %v1941 = vunpack.c.l.b16 %v484
    %v1942 = vunpack.c.h.b16 %v484
    %v1943 = vunpack.c.l.b16 %v485
    %v1944 = vunpack.c.h.b16 %v485
    %v1945 = vunpack.c.l.b16 %v486
    %v1946 = vunpack.c.h.b16 %v486
    %v1947 = vunpack.c.l.b16 %v487
    %v1948 = vunpack.c.h.b16 %v487
    %v1949 = vunpack.c.l.b16 %v488
    %v1950 = vunpack.c.h.b16 %v488
    %v1951 = vunpack.c.l.b16 %v489
    %v1952 = vunpack.c.h.b16 %v489
    %v1953 = vunpack.c.l.b16 %v490
    %v1954 = vunpack.c.h.b16 %v490
    %v1955 = vunpack.c.l.b16 %v491
    %v1956 = vunpack.c.h.b16 %v491
    %v1957 = vunpack.c.l.b16 %v492
    %v1958 = vunpack.c.h.b16 %v492
    %v1959 = vunpack.c.l.b16 %v493
    %v1960 = vunpack.c.h.b16 %v493
    %v1961 = vunpack.c.l.b16 %v494
    %v1962 = vunpack.c.h.b16 %v494
    %v1963 = vunpack.c.l.b16 %v495
    %v1964 = vunpack.c.h.b16 %v495
    %v1965 = vunpack.c.l.b16 %v496
    %v1966 = vunpack.c.h.b16 %v496
    %v1967 = vunpack.c.l.b16 %v497
    %v1968 = vunpack.c.h.b16 %v497
    %v1969 = vunpack.c.l.b16 %v498
    %v1970 = vunpack.c.h.b16 %v498
    %v1971 = vunpack.c.l.b16 %v499
    %v1972 = vunpack.c.h.b16 %v499
    %v1973 = vunpack.c.l.b16 %v500
    %v1974 = vunpack.c.h.b16 %v500
    %v1975 = vunpack.c.l.b16 %v501
    %v1976 = vunpack.c.h.b16 %v501
    %v1977 = vunpack.c.l.b16 %v502
    %v1978 = vunpack.c.h.b16 %v502
    %v1979 = vunpack.c.l.b16 %v503
    %v1980 = vunpack.c.h.b16 %v503
    %v1981 = vunpack.c.l.b16 %v504
    %v1982 = vunpack.c.h.b16 %v504
    %v1983 = vunpack.c.l.b16 %v505
    %v1984 = vunpack.c.h.b16 %v505
    %v1985 = vunpack.c.l.b16 %v506
    %v1986 = vunpack.c.h.b16 %v506
    %v1987 = vunpack.c.l.b16 %v507
    %v1988 = vunpack.c.h.b16 %v507
    %v1989 = vunpack.c.l.b16 %v508
    %v1990 = vunpack.c.h.b16 %v508
    %v1991 = vunpack.c.l.b16 %v509
    %v1992 = vunpack.c.h.b16 %v509
    %v1993 = vunpack.c.l.b16 %v510
    %v1994 = vunpack.c.h.b16 %v510
    %v1995 = vunpack.c.l.b16 %v511
    %v1996 = vunpack.c.h.b16 %v511
    %v1997 = vunpack.c.l.b16 %v512
    %v1998 = vunpack.c.h.b16 %v512
    %v1999 = vunpack.c.l.b16 %v513
    %v2000 = vunpack.c.h.b16 %v513
    %v2001 = vunpack.c.l.b16 %v514
    %v2002 = vunpack.c.h.b16 %v514
    %v2003 = vunpack.c.l.b16 %v515
    %v2004 = vunpack.c.h.b16 %v515
    %v2005 = vunpack.c.l.b16 %v516
    %v2006 = vunpack.c.h.b16 %v516
    %v2007 = vunpack.c.l.b16 %v517
    %v2008 = vunpack.c.h.b16 %v517
    %v2009 = vunpack.c.l.b16 %v518
    %v2010 = vunpack.c.h.b16 %v518
    %v2011 = vunpack.c.l.b16 %v519
    %v2012 = vunpack.c.h.b16 %v519
    %v2013 = vunpack.c.l.b16 %v520
    %v2014 = vunpack.c.h.b16 %v520
    %v2015 = vunpack.c.l.b16 %v521
    %v2016 = vunpack.c.h.b16 %v521
    %v2017 = vunpack.c.l.b16 %v522
    %v2018 = vunpack.c.h.b16 %v522
    %v2019 = vunpack.c.l.b16 %v523
    %v2020 = vunpack.c.h.b16 %v523
    %v2021 = vunpack.c.l.b16 %v524
    %v2022 = vunpack.c.h.b16 %v524
    %v2023 = vunpack.c.l.b16 %v525
    %v2024 = vunpack.c.h.b16 %v525
    %v2025 = vunpack.c.l.b16 %v526
    %v2026 = vunpack.c.h.b16 %v526
    %v2027 = vunpack.c.l.b16 %v527
    %v2028 = vunpack.c.h.b16 %v527
    %v2029 = vunpack.c.l.b16 %v528
    %v2030 = vunpack.c.h.b16 %v528
    %v2031 = vunpack.c.l.b16 %v529
    %v2032 = vunpack.c.h.b16 %v529
    %v2033 = vunpack.c.l.b16 %v530
    %v2034 = vunpack.c.h.b16 %v530
    %v2035 = vunpack.c.l.b16 %v531
    %v2036 = vunpack.c.h.b16 %v531
    %v2037 = vunpack.c.l.b16 %v532
    %v2038 = vunpack.c.h.b16 %v532
    %v2039 = vunpack.c.l.b16 %v533
    %v2040 = vunpack.c.h.b16 %v533
    %v2041 = vunpack.c.l.b16 %v534
    %v2042 = vunpack.c.h.b16 %v534
    %v2043 = vunpack.c.l.b16 %v535
    %v2044 = vunpack.c.h.b16 %v535
    %v2045 = vunpack.c.l.b16 %v536
    %v2046 = vunpack.c.h.b16 %v536
    %v2047 = vunpack.c.l.b16 %v537
    %v2048 = vunpack.c.h.b16 %v537
    %v2049 = vunpack.c.l.b16 %v538
    %v2050 = vunpack.c.h.b16 %v538
    %v2051 = vunpack.c.l.b16 %v539
    %v2052 = vunpack.c.h.b16 %v539
    %v2053 = vunpack.c.l.b16 %v540
    %v2054 = vunpack.c.h.b16 %v540
    %v2055 = vunpack.c.l.b16 %v541
    %v2056 = vunpack.c.h.b16 %v541
    %v2057 = vunpack.c.l.b16 %v542
    %v2058 = vunpack.c.h.b16 %v542
    %v2059 = vunpack.c.l.b16 %v543
    %v2060 = vunpack.c.h.b16 %v543
    %v2061 = vunpack.c.l.b16 %v544
    %v2062 = vunpack.c.h.b16 %v544
    %v2063 = vunpack.c.l.b16 %v545
    %v2064 = vunpack.c.h.b16 %v545
    %v2065 = vunpack.c.l.b16 %v546
    %v2066 = vunpack.c.h.b16 %v546
    %v2067 = vunpack.c.l.b16 %v547
    %v2068 = vunpack.c.h.b16 %v547
    %v2069 = vunpack.c.l.b16 %v548
    %v2070 = vunpack.c.h.b16 %v548
    %v2071 = vunpack.c.l.b16 %v549
    %v2072 = vunpack.c.h.b16 %v549
    %v2073 = vunpack.c.l.b16 %v550
    %v2074 = vunpack.c.h.b16 %v550
    %v2075 = vunpack.c.l.b16 %v551
    %v2076 = vunpack.c.h.b16 %v551
    %v2077 = vunpack.c.l.b16 %v552
    %v2078 = vunpack.c.h.b16 %v552
    %v2079 = vunpack.c.l.b16 %v553
    %v2080 = vunpack.c.h.b16 %v553
    %v2081 = vunpack.c.l.b16 %v554
    %v2082 = vunpack.c.h.b16 %v554
    %v2083 = vunpack.c.l.b16 %v555
    %v2084 = vunpack.c.h.b16 %v555
    %v2085 = vunpack.c.l.b16 %v556
    %v2086 = vunpack.c.h.b16 %v556
    %v2087 = vunpack.c.l.b16 %v557
    %v2088 = vunpack.c.h.b16 %v557
    %v2089 = vunpack.c.l.b16 %v558
    %v2090 = vunpack.c.h.b16 %v558
    %v2091 = vunpack.c.l.b16 %v559
    %v2092 = vunpack.c.h.b16 %v559
    %v2093 = vunpack.c.l.b16 %v560
    %v2094 = vunpack.c.h.b16 %v560
    %v2095 = vunpack.c.l.b16 %v561
    %v2096 = vunpack.c.h.b16 %v561
    %v2097 = vunpack.c.l.b16 %v562
    %v2098 = vunpack.c.h.b16 %v562
    %v2099 = vunpack.c.l.b16 %v563
    %v2100 = vunpack.c.h.b16 %v563
    %v2101 = vunpack.c.l.b16 %v564
    %v2102 = vunpack.c.h.b16 %v564
    %v2103 = vunpack.c.l.b16 %v565
    %v2104 = vunpack.c.h.b16 %v565
    %v2105 = vunpack.c.l.b16 %v566
    %v2106 = vunpack.c.h.b16 %v566
    %v2107 = vunpack.c.l.b16 %v567
    %v2108 = vunpack.c.h.b16 %v567
    %v2109 = vunpack.c.l.b16 %v568
    %v2110 = vunpack.c.h.b16 %v568
    %v2111 = vpack.c.b16 %v1119, %v1111
    %v2112 = vpack.c.b16 %v1120, %v1112
    %v2113 = vpack.c.b16 %v1121, %v1113
    %v2114 = vpack.c.b16 %v1122, %v1114
    %v2115 = vpack.c.b16 %v1123, %v1115
    %v2116 = vpack.c.b16 %v1124, %v1116
    %v2117 = vpack.c.b16 %v1125, %v1117
    %v2118 = vpack.c.b16 %v1126, %v1118
    %v2119 = vpack.c.b16 %v1135, %v1127
    %v2120 = vpack.c.b16 %v1136, %v1128
    %v2121 = vpack.c.b16 %v1137, %v1129
    %v2122 = vpack.c.b16 %v1138, %v1130
    %v2123 = vpack.c.b16 %v1139, %v1131
    %v2124 = vpack.c.b16 %v1140, %v1132
    %v2125 = vpack.c.b16 %v1141, %v1133
    %v2126 = vpack.c.b16 %v1142, %v1134
    %v2127 = vpack.c.b16 %v1151, %v1143
    %v2128 = vpack.c.b16 %v1152, %v1144
    %v2129 = vpack.c.b16 %v1153, %v1145
    %v2130 = vpack.c.b16 %v1154, %v1146
    %v2131 = vpack.c.b16 %v1155, %v1147
    %v2132 = vpack.c.b16 %v1156, %v1148
    %v2133 = vpack.c.b16 %v1157, %v1149
    %v2134 = vpack.c.b16 %v1158, %v1150
    %v2135 = vpack.c.b16 %v1167, %v1159
    %v2136 = vpack.c.b16 %v1168, %v1160
    %v2137 = vpack.c.b16 %v1169, %v1161
    %v2138 = vpack.c.b16 %v1170, %v1162
    %v2139 = vpack.c.b16 %v1171, %v1163
    %v2140 = vpack.c.b16 %v1172, %v1164
    %v2141 = vpack.c.b16 %v1173, %v1165
    %v2142 = vpack.c.b16 %v1174, %v1166
    %v2143 = vpack.c.b16 %v1183, %v1175
    %v2144 = vpack.c.b16 %v1184, %v1176
    %v2145 = vpack.c.b16 %v1185, %v1177
    %v2146 = vpack.c.b16 %v1186, %v1178
    %v2147 = vpack.c.b16 %v1187, %v1179
    %v2148 = vpack.c.b16 %v1188, %v1180
    %v2149 = vpack.c.b16 %v1189, %v1181
    %v2150 = vpack.c.b16 %v1190, %v1182
    %v2151 = vpack.c.b16 %v1199, %v1191
    %v2152 = vpack.c.b16 %v1200, %v1192
    %v2153 = vpack.c.b16 %v1201, %v1193
    %v2154 = vpack.c.b16 %v1202, %v1194
    %v2155 = vpack.c.b16 %v1203, %v1195
    %v2156 = vpack.c.b16 %v1204, %v1196
    %v2157 = vpack.c.b16 %v1205, %v1197
    %v2158 = vpack.c.b16 %v1206, %v1198
    %v2159 = vpack.c.b16 %v1215, %v1207
    %v2160 = vpack.c.b16 %v1216, %v1208
    %v2161 = vpack.c.b16 %v1217, %v1209
    %v2162 = vpack.c.b16 %v1218, %v1210
    %v2163 = vpack.c.b16 %v1219, %v1211
    %v2164 = vpack.c.b16 %v1220, %v1212
    %v2165 = vpack.c.b16 %v1221, %v1213
    %v2166 = vpack.c.b16 %v1222, %v1214
    %v2167 = vpack.c.b16 %v1231, %v1223
    %v2168 = vpack.c.b16 %v1232, %v1224
    %v2169 = vpack.c.b16 %v1233, %v1225
    %v2170 = vpack.c.b16 %v1234, %v1226
    %v2171 = vpack.c.b16 %v1235, %v1227
    %v2172 = vpack.c.b16 %v1236, %v1228
    %v2173 = vpack.c.b16 %v1237, %v1229
    %v2174 = vpack.c.b16 %v1238, %v1230
    %v2175 = vpack.c.b16 %v1247, %v1239
    %v2176 = vpack.c.b16 %v1248, %v1240
    %v2177 = vpack.c.b16 %v1249, %v1241
    %v2178 = vpack.c.b16 %v1250, %v1242
    %v2179 = vpack.c.b16 %v1251, %v1243
    %v2180 = vpack.c.b16 %v1252, %v1244
    %v2181 = vpack.c.b16 %v1253, %v1245
    %v2182 = vpack.c.b16 %v1254, %v1246
    %v2183 = vpack.c.b16 %v1263, %v1255
    %v2184 = vpack.c.b16 %v1264, %v1256
    %v2185 = vpack.c.b16 %v1265, %v1257
    %v2186 = vpack.c.b16 %v1266, %v1258
    %v2187 = vpack.c.b16 %v1267, %v1259
    %v2188 = vpack.c.b16 %v1268, %v1260
    %v2189 = vpack.c.b16 %v1269, %v1261
    %v2190 = vpack.c.b16 %v1270, %v1262
    %v2191 = vpack.c.b16 %v1279, %v1271
    %v2192 = vpack.c.b16 %v1280, %v1272
    %v2193 = vpack.c.b16 %v1281, %v1273
    %v2194 = vpack.c.b16 %v1282, %v1274
    %v2195 = vpack.c.b16 %v1283, %v1275
    %v2196 = vpack.c.b16 %v1284, %v1276
    %v2197 = vpack.c.b16 %v1285, %v1277
    %v2198 = vpack.c.b16 %v1286, %v1278
    %v2199 = vpack.c.b16 %v1295, %v1287
    %v2200 = vpack.c.b16 %v1296, %v1288
    %v2201 = vpack.c.b16 %v1297, %v1289
    %v2202 = vpack.c.b16 %v1298, %v1290
    %v2203 = vpack.c.b16 %v1299, %v1291
    %v2204 = vpack.c.b16 %v1300, %v1292
    %v2205 = vpack.c.b16 %v1301, %v1293
    %v2206 = vpack.c.b16 %v1302, %v1294
    %v2207 = vpack.c.b16 %v1311, %v1303
    %v2208 = vpack.c.b16 %v1312, %v1304
    %v2209 = vpack.c.b16 %v1313, %v1305
    %v2210 = vpack.c.b16 %v1314, %v1306
    %v2211 = vpack.c.b16 %v1315, %v1307
    %v2212 = vpack.c.b16 %v1316, %v1308
    %v2213 = vpack.c.b16 %v1317, %v1309
    %v2214 = vpack.c.b16 %v1318, %v1310
    %v2215 = vpack.c.b16 %v1327, %v1319
    %v2216 = vpack.c.b16 %v1328, %v1320
    %v2217 = vpack.c.b16 %v1329, %v1321
    %v2218 = vpack.c.b16 %v1330, %v1322
    %v2219 = vpack.c.b16 %v1331, %v1323
    %v2220 = vpack.c.b16 %v1332, %v1324
    %v2221 = vpack.c.b16 %v1333, %v1325
    %v2222 = vpack.c.b16 %v1334, %v1326
    %v2223 = vpack.c.b16 %v1343, %v1335
    %v2224 = vpack.c.b16 %v1344, %v1336
    %v2225 = vpack.c.b16 %v1345, %v1337
    %v2226 = vpack.c.b16 %v1346, %v1338
    %v2227 = vpack.c.b16 %v1347, %v1339
    %v2228 = vpack.c.b16 %v1348, %v1340
    %v2229 = vpack.c.b16 %v1349, %v1341
    %v2230 = vpack.c.b16 %v1350, %v1342
    %v2231 = vpack.c.b16 %v1359, %v1351
    %v2232 = vpack.c.b16 %v1360, %v1352
    %v2233 = vpack.c.b16 %v1361, %v1353
    %v2234 = vpack.c.b16 %v1362, %v1354
    %v2235 = vpack.c.b16 %v1363, %v1355
    %v2236 = vpack.c.b16 %v1364, %v1356
    %v2237 = vpack.c.b16 %v1365, %v1357
    %v2238 = vpack.c.b16 %v1366, %v1358
    %v2239 = vpack.c.b16 %v1375, %v1367
    %v2240 = vpack.c.b16 %v1376, %v1368
    %v2241 = vpack.c.b16 %v1377, %v1369
    %v2242 = vpack.c.b16 %v1378, %v1370
    %v2243 = vpack.c.b16 %v1379, %v1371
    %v2244 = vpack.c.b16 %v1380, %v1372
    %v2245 = vpack.c.b16 %v1381, %v1373
    %v2246 = vpack.c.b16 %v1382, %v1374
    %v2247 = vpack.c.b16 %v1391, %v1383
    %v2248 = vpack.c.b16 %v1392, %v1384
    %v2249 = vpack.c.b16 %v1393, %v1385
    %v2250 = vpack.c.b16 %v1394, %v1386
    %v2251 = vpack.c.b16 %v1395, %v1387
    %v2252 = vpack.c.b16 %v1396, %v1388
    %v2253 = vpack.c.b16 %v1397, %v1389
    %v2254 = vpack.c.b16 %v1398, %v1390
    %v2255 = vpack.c.b16 %v1407, %v1399
    %v2256 = vpack.c.b16 %v1408, %v1400
    %v2257 = vpack.c.b16 %v1409, %v1401
    %v2258 = vpack.c.b16 %v1410, %v1402
    %v2259 = vpack.c.b16 %v1411, %v1403
    %v2260 = vpack.c.b16 %v1412, %v1404
    %v2261 = vpack.c.b16 %v1413, %v1405
    %v2262 = vpack.c.b16 %v1414, %v1406
    %v2263 = vpack.c.b16 %v1423, %v1415
    %v2264 = vpack.c.b16 %v1424, %v1416
    %v2265 = vpack.c.b16 %v1425, %v1417
    %v2266 = vpack.c.b16 %v1426, %v1418
    %v2267 = vpack.c.b16 %v1427, %v1419
    %v2268 = vpack.c.b16 %v1428, %v1420
    %v2269 = vpack.c.b16 %v1429, %v1421
    %v2270 = vpack.c.b16 %v1430, %v1422
    %v2271 = vpack.c.b16 %v1439, %v1431
    %v2272 = vpack.c.b16 %v1440, %v1432
    %v2273 = vpack.c.b16 %v1441, %v1433
    %v2274 = vpack.c.b16 %v1442, %v1434
    %v2275 = vpack.c.b16 %v1443, %v1435
    %v2276 = vpack.c.b16 %v1444, %v1436
    %v2277 = vpack.c.b16 %v1445, %v1437
    %v2278 = vpack.c.b16 %v1446, %v1438
    %v2279 = vpack.c.b16 %v1455, %v1447
    %v2280 = vpack.c.b16 %v1456, %v1448
    %v2281 = vpack.c.b16 %v1457, %v1449
    %v2282 = vpack.c.b16 %v1458, %v1450
    %v2283 = vpack.c.b16 %v1459, %v1451
    %v2284 = vpack.c.b16 %v1460, %v1452
    %v2285 = vpack.c.b16 %v1461, %v1453
    %v2286 = vpack.c.b16 %v1462, %v1454
    %v2287 = vpack.c.b16 %v1471, %v1463
    %v2288 = vpack.c.b16 %v1472, %v1464
    %v2289 = vpack.c.b16 %v1473, %v1465
    %v2290 = vpack.c.b16 %v1474, %v1466
    %v2291 = vpack.c.b16 %v1475, %v1467
    %v2292 = vpack.c.b16 %v1476, %v1468
    %v2293 = vpack.c.b16 %v1477, %v1469
    %v2294 = vpack.c.b16 %v1478, %v1470
    %v2295 = vpack.c.b16 %v1487, %v1479
    %v2296 = vpack.c.b16 %v1488, %v1480
    %v2297 = vpack.c.b16 %v1489, %v1481
    %v2298 = vpack.c.b16 %v1490, %v1482
    %v2299 = vpack.c.b16 %v1491, %v1483
    %v2300 = vpack.c.b16 %v1492, %v1484
    %v2301 = vpack.c.b16 %v1493, %v1485
    %v2302 = vpack.c.b16 %v1494, %v1486
    %v2303 = vpack.c.b16 %v1503, %v1495
    %v2304 = vpack.c.b16 %v1504, %v1496
    %v2305 = vpack.c.b16 %v1505, %v1497
    %v2306 = vpack.c.b16 %v1506, %v1498
    %v2307 = vpack.c.b16 %v1507, %v1499
    %v2308 = vpack.c.b16 %v1508, %v1500
    %v2309 = vpack.c.b16 %v1509, %v1501
    %v2310 = vpack.c.b16 %v1510, %v1502
    %v2311 = vpack.c.b16 %v1519, %v1511
    %v2312 = vpack.c.b16 %v1520, %v1512
    %v2313 = vpack.c.b16 %v1521, %v1513
    %v2314 = vpack.c.b16 %v1522, %v1514
    %v2315 = vpack.c.b16 %v1523, %v1515
    %v2316 = vpack.c.b16 %v1524, %v1516
    %v2317 = vpack.c.b16 %v1525, %v1517
    %v2318 = vpack.c.b16 %v1526, %v1518
    %v2319 = vpack.c.b16 %v1535, %v1527
    %v2320 = vpack.c.b16 %v1536, %v1528
    %v2321 = vpack.c.b16 %v1537, %v1529
    %v2322 = vpack.c.b16 %v1538, %v1530
    %v2323 = vpack.c.b16 %v1539, %v1531
    %v2324 = vpack.c.b16 %v1540, %v1532
    %v2325 = vpack.c.b16 %v1541, %v1533
    %v2326 = vpack.c.b16 %v1542, %v1534
    %v2327 = vpack.c.b16 %v1551, %v1543
    %v2328 = vpack.c.b16 %v1552, %v1544
    %v2329 = vpack.c.b16 %v1553, %v1545
    %v2330 = vpack.c.b16 %v1554, %v1546
    %v2331 = vpack.c.b16 %v1555, %v1547
    %v2332 = vpack.c.b16 %v1556, %v1548
    %v2333 = vpack.c.b16 %v1557, %v1549
    %v2334 = vpack.c.b16 %v1558, %v1550
    %v2335 = vpack.c.b16 %v1567, %v1559
    %v2336 = vpack.c.b16 %v1568, %v1560
    %v2337 = vpack.c.b16 %v1569, %v1561
    %v2338 = vpack.c.b16 %v1570, %v1562
    %v2339 = vpack.c.b16 %v1571, %v1563
    %v2340 = vpack.c.b16 %v1572, %v1564
    %v2341 = vpack.c.b16 %v1573, %v1565
    %v2342 = vpack.c.b16 %v1574, %v1566
    %v2343 = vpack.c.b16 %v1583, %v1575
    %v2344 = vpack.c.b16 %v1584, %v1576
    %v2345 = vpack.c.b16 %v1585, %v1577
    %v2346 = vpack.c.b16 %v1586, %v1578
    %v2347 = vpack.c.b16 %v1587, %v1579
    %v2348 = vpack.c.b16 %v1588, %v1580
    %v2349 = vpack.c.b16 %v1589, %v1581
    %v2350 = vpack.c.b16 %v1590, %v1582
    %v2351 = vpack.c.b16 %v1599, %v1591
    %v2352 = vpack.c.b16 %v1600, %v1592
    %v2353 = vpack.c.b16 %v1601, %v1593
    %v2354 = vpack.c.b16 %v1602, %v1594
    %v2355 = vpack.c.b16 %v1603, %v1595
    %v2356 = vpack.c.b16 %v1604, %v1596
    %v2357 = vpack.c.b16 %v1605, %v1597
    %v2358 = vpack.c.b16 %v1606, %v1598
    %v2359 = vpack.c.b16 %v1615, %v1607
    %v2360 = vpack.c.b16 %v1616, %v1608
    %v2361 = vpack.c.b16 %v1617, %v1609
    %v2362 = vpack.c.b16 %v1618, %v1610
    %v2363 = vpack.c.b16 %v1619, %v1611
    %v2364 = vpack.c.b16 %v1620, %v1612
    %v2365 = vpack.c.b16 %v1621, %v1613
    %v2366 = vpack.c.b16 %v1622, %v1614
    %v2367 = vpack.c.b16 %v1631, %v1623
    %v2368 = vpack.c.b16 %v1632, %v1624
    %v2369 = vpack.c.b16 %v1633, %v1625
    %v2370 = vpack.c.b16 %v1634, %v1626
    %v2371 = vpack.c.b16 %v1635, %v1627
    %v2372 = vpack.c.b16 %v1636, %v1628
    %v2373 = vpack.c.b16 %v1637, %v1629
    %v2374 = vpack.c.b16 %v1638, %v1630
    %v2375 = vpack.c.b16 %v1647, %v1639
    %v2376 = vpack.c.b16 %v1648, %v1640
    %v2377 = vpack.c.b16 %v1649, %v1641
    %v2378 = vpack.c.b16 %v1650, %v1642
    %v2379 = vpack.c.b16 %v1651, %v1643
    %v2380 = vpack.c.b16 %v1652, %v1644
    %v2381 = vpack.c.b16 %v1653, %v1645
    %v2382 = vpack.c.b16 %v1654, %v1646
    %v2383 = vpack.c.b16 %v1663, %v1655
    %v2384 = vpack.c.b16 %v1664, %v1656
    %v2385 = vpack.c.b16 %v1665, %v1657
    %v2386 = vpack.c.b16 %v1666, %v1658
    %v2387 = vpack.c.b16 %v1667, %v1659
    %v2388 = vpack.c.b16 %v1668, %v1660
    %v2389 = vpack.c.b16 %v1669, %v1661
    %v2390 = vpack.c.b16 %v1670, %v1662
    %v2391 = vpack.c.b16 %v1679, %v1671
    %v2392 = vpack.c.b16 %v1680, %v1672
    %v2393 = vpack.c.b16 %v1681, %v1673
    %v2394 = vpack.c.b16 %v1682, %v1674
    %v2395 = vpack.c.b16 %v1683, %v1675
    %v2396 = vpack.c.b16 %v1684, %v1676
    %v2397 = vpack.c.b16 %v1685, %v1677
    %v2398 = vpack.c.b16 %v1686, %v1678
    %v2399 = vpack.c.b16 %v1695, %v1687
    %v2400 = vpack.c.b16 %v1696, %v1688
    %v2401 = vpack.c.b16 %v1697, %v1689
    %v2402 = vpack.c.b16 %v1698, %v1690
    %v2403 = vpack.c.b16 %v1699, %v1691
    %v2404 = vpack.c.b16 %v1700, %v1692
    %v2405 = vpack.c.b16 %v1701, %v1693
    %v2406 = vpack.c.b16 %v1702, %v1694
    %v2407 = vpack.c.b16 %v1711, %v1703
    %v2408 = vpack.c.b16 %v1712, %v1704
    %v2409 = vpack.c.b16 %v1713, %v1705
    %v2410 = vpack.c.b16 %v1714, %v1706
    %v2411 = vpack.c.b16 %v1715, %v1707
    %v2412 = vpack.c.b16 %v1716, %v1708
    %v2413 = vpack.c.b16 %v1717, %v1709
    %v2414 = vpack.c.b16 %v1718, %v1710
    %v2415 = vpack.c.b16 %v1727, %v1719
    %v2416 = vpack.c.b16 %v1728, %v1720
    %v2417 = vpack.c.b16 %v1729, %v1721
    %v2418 = vpack.c.b16 %v1730, %v1722
    %v2419 = vpack.c.b16 %v1731, %v1723
    %v2420 = vpack.c.b16 %v1732, %v1724
    %v2421 = vpack.c.b16 %v1733, %v1725
    %v2422 = vpack.c.b16 %v1734, %v1726
    %v2423 = vpack.c.b16 %v1743, %v1735
    %v2424 = vpack.c.b16 %v1744, %v1736
    %v2425 = vpack.c.b16 %v1745, %v1737
    %v2426 = vpack.c.b16 %v1746, %v1738
    %v2427 = vpack.c.b16 %v1747, %v1739
    %v2428 = vpack.c.b16 %v1748, %v1740
    %v2429 = vpack.c.b16 %v1749, %v1741
    %v2430 = vpack.c.b16 %v1750, %v1742
    %v2431 = vpack.c.b16 %v1759, %v1751
    %v2432 = vpack.c.b16 %v1760, %v1752
    %v2433 = vpack.c.b16 %v1761, %v1753
    %v2434 = vpack.c.b16 %v1762, %v1754
    %v2435 = vpack.c.b16 %v1763, %v1755
    %v2436 = vpack.c.b16 %v1764, %v1756
    %v2437 = vpack.c.b16 %v1765, %v1757
    %v2438 = vpack.c.b16 %v1766, %v1758
    %v2439 = vpack.c.b16 %v1775, %v1767
    %v2440 = vpack.c.b16 %v1776, %v1768
    %v2441 = vpack.c.b16 %v1777, %v1769
    %v2442 = vpack.c.b16 %v1778, %v1770
    %v2443 = vpack.c.b16 %v1779, %v1771
    %v2444 = vpack.c.b16 %v1780, %v1772
    %v2445 = vpack.c.b16 %v1781, %v1773
    %v2446 = vpack.c.b16 %v1782, %v1774
    %v2447 = vpack.c.b16 %v1791, %v1783
    %v2448 = vpack.c.b16 %v1792, %v1784
    %v2449 = vpack.c.b16 %v1793, %v1785
    %v2450 = vpack.c.b16 %v1794, %v1786
    %v2451 = vpack.c.b16 %v1795, %v1787
    %v2452 = vpack.c.b16 %v1796, %v1788
    %v2453 = vpack.c.b16 %v1797, %v1789
    %v2454 = vpack.c.b16 %v1798, %v1790
    %v2455 = vpack.c.b16 %v1807, %v1799
    %v2456 = vpack.c.b16 %v1808, %v1800
    %v2457 = vpack.c.b16 %v1809, %v1801
    %v2458 = vpack.c.b16 %v1810, %v1802
    %v2459 = vpack.c.b16 %v1811, %v1803
    %v2460 = vpack.c.b16 %v1812, %v1804
    %v2461 = vpack.c.b16 %v1813, %v1805
    %v2462 = vpack.c.b16 %v1814, %v1806
    %v2463 = vpack.c.b16 %v1823, %v1815
    %v2464 = vpack.c.b16 %v1824, %v1816
    %v2465 = vpack.c.b16 %v1825, %v1817
    %v2466 = vpack.c.b16 %v1826, %v1818
    %v2467 = vpack.c.b16 %v1827, %v1819
    %v2468 = vpack.c.b16 %v1828, %v1820
    %v2469 = vpack.c.b16 %v1829, %v1821
    %v2470 = vpack.c.b16 %v1830, %v1822
    %v2471 = vpack.c.b16 %v1839, %v1831
    %v2472 = vpack.c.b16 %v1840, %v1832
    %v2473 = vpack.c.b16 %v1841, %v1833
    %v2474 = vpack.c.b16 %v1842, %v1834
    %v2475 = vpack.c.b16 %v1843, %v1835
    %v2476 = vpack.c.b16 %v1844, %v1836
    %v2477 = vpack.c.b16 %v1845, %v1837
    %v2478 = vpack.c.b16 %v1846, %v1838
    %v2479 = vpack.c.b16 %v1855, %v1847
    %v2480 = vpack.c.b16 %v1856, %v1848
    %v2481 = vpack.c.b16 %v1857, %v1849
    %v2482 = vpack.c.b16 %v1858, %v1850
    %v2483 = vpack.c.b16 %v1859, %v1851
    %v2484 = vpack.c.b16 %v1860, %v1852
    %v2485 = vpack.c.b16 %v1861, %v1853
    %v2486 = vpack.c.b16 %v1862, %v1854
    %v2487 = vpack.c.b16 %v1871, %v1863
    %v2488 = vpack.c.b16 %v1872, %v1864
    %v2489 = vpack.c.b16 %v1873, %v1865
    %v2490 = vpack.c.b16 %v1874, %v1866
    %v2491 = vpack.c.b16 %v1875, %v1867
    %v2492 = vpack.c.b16 %v1876, %v1868
    %v2493 = vpack.c.b16 %v1877, %v1869
    %v2494 = vpack.c.b16 %v1878, %v1870
    %v2495 = vpack.c.b16 %v1887, %v1879
    %v2496 = vpack.c.b16 %v1888, %v1880
    %v2497 = vpack.c.b16 %v1889, %v1881
    %v2498 = vpack.c.b16 %v1890, %v1882
    %v2499 = vpack.c.b16 %v1891, %v1883
    %v2500 = vpack.c.b16 %v1892, %v1884
    %v2501 = vpack.c.b16 %v1893, %v1885
    %v2502 = vpack.c.b16 %v1894, %v1886
    %v2503 = vpack.c.b16 %v1903, %v1895
    %v2504 = vpack.c.b16 %v1904, %v1896
    %v2505 = vpack.c.b16 %v1905, %v1897
    %v2506 = vpack.c.b16 %v1906, %v1898
    %v2507 = vpack.c.b16 %v1907, %v1899
    %v2508 = vpack.c.b16 %v1908, %v1900
    %v2509 = vpack.c.b16 %v1909, %v1901
    %v2510 = vpack.c.b16 %v1910, %v1902
    %v2511 = vpack.c.b16 %v1919, %v1911
    %v2512 = vpack.c.b16 %v1920, %v1912
    %v2513 = vpack.c.b16 %v1921, %v1913
    %v2514 = vpack.c.b16 %v1922, %v1914
    %v2515 = vpack.c.b16 %v1923, %v1915
    %v2516 = vpack.c.b16 %v1924, %v1916
    %v2517 = vpack.c.b16 %v1925, %v1917
    %v2518 = vpack.c.b16 %v1926, %v1918
    %v2519 = vpack.c.b16 %v1935, %v1927
    %v2520 = vpack.c.b16 %v1936, %v1928
    %v2521 = vpack.c.b16 %v1937, %v1929
    %v2522 = vpack.c.b16 %v1938, %v1930
    %v2523 = vpack.c.b16 %v1939, %v1931
    %v2524 = vpack.c.b16 %v1940, %v1932
    %v2525 = vpack.c.b16 %v1941, %v1933
    %v2526 = vpack.c.b16 %v1942, %v1934
    %v2527 = vpack.c.b16 %v1951, %v1943
    %v2528 = vpack.c.b16 %v1952, %v1944
    %v2529 = vpack.c.b16 %v1953, %v1945
    %v2530 = vpack.c.b16 %v1954, %v1946
    %v2531 = vpack.c.b16 %v1955, %v1947
    %v2532 = vpack.c.b16 %v1956, %v1948
    %v2533 = vpack.c.b16 %v1957, %v1949
    %v2534 = vpack.c.b16 %v1958, %v1950
    %v2535 = vpack.c.b16 %v1967, %v1959
    %v2536 = vpack.c.b16 %v1968, %v1960
    %v2537 = vpack.c.b16 %v1969, %v1961
    %v2538 = vpack.c.b16 %v1970, %v1962
    %v2539 = vpack.c.b16 %v1971, %v1963
    %v2540 = vpack.c.b16 %v1972, %v1964
    %v2541 = vpack.c.b16 %v1973, %v1965
    %v2542 = vpack.c.b16 %v1974, %v1966
    %v2543 = vpack.c.b16 %v1983, %v1975
    %v2544 = vpack.c.b16 %v1984, %v1976
    %v2545 = vpack.c.b16 %v1985, %v1977
    %v2546 = vpack.c.b16 %v1986, %v1978
    %v2547 = vpack.c.b16 %v1987, %v1979
    %v2548 = vpack.c.b16 %v1988, %v1980
    %v2549 = vpack.c.b16 %v1989, %v1981
    %v2550 = vpack.c.b16 %v1990, %v1982
    %v2551 = vpack.c.b16 %v1999, %v1991
    %v2552 = vpack.c.b16 %v2000, %v1992
    %v2553 = vpack.c.b16 %v2001, %v1993
    %v2554 = vpack.c.b16 %v2002, %v1994
    %v2555 = vpack.c.b16 %v2003, %v1995
    %v2556 = vpack.c.b16 %v2004, %v1996
    %v2557 = vpack.c.b16 %v2005, %v1997
    %v2558 = vpack.c.b16 %v2006, %v1998
    %v2559 = vpack.c.b16 %v2015, %v2007
    %v2560 = vpack.c.b16 %v2016, %v2008
    %v2561 = vpack.c.b16 %v2017, %v2009
    %v2562 = vpack.c.b16 %v2018, %v2010
    %v2563 = vpack.c.b16 %v2019, %v2011
    %v2564 = vpack.c.b16 %v2020, %v2012
    %v2565 = vpack.c.b16 %v2021, %v2013
    %v2566 = vpack.c.b16 %v2022, %v2014
    %v2567 = vpack.c.b16 %v2031, %v2023
    %v2568 = vpack.c.b16 %v2032, %v2024
    %v2569 = vpack.c.b16 %v2033, %v2025
    %v2570 = vpack.c.b16 %v2034, %v2026
    %v2571 = vpack.c.b16 %v2035, %v2027
    %v2572 = vpack.c.b16 %v2036, %v2028
    %v2573 = vpack.c.b16 %v2037, %v2029
    %v2574 = vpack.c.b16 %v2038, %v2030
    %v2575 = vpack.c.b16 %v2047, %v2039
    %v2576 = vpack.c.b16 %v2048, %v2040
    %v2577 = vpack.c.b16 %v2049, %v2041
    %v2578 = vpack.c.b16 %v2050, %v2042
    %v2579 = vpack.c.b16 %v2051, %v2043
    %v2580 = vpack.c.b16 %v2052, %v2044
    %v2581 = vpack.c.b16 %v2053, %v2045
    %v2582 = vpack.c.b16 %v2054, %v2046
    %v2583 = vpack.c.b16 %v2063, %v2055
    %v2584 = vpack.c.b16 %v2064, %v2056
    %v2585 = vpack.c.b16 %v2065, %v2057
    %v2586 = vpack.c.b16 %v2066, %v2058
    %v2587 = vpack.c.b16 %v2067, %v2059
    %v2588 = vpack.c.b16 %v2068, %v2060
    %v2589 = vpack.c.b16 %v2069, %v2061
    %v2590 = vpack.c.b16 %v2070, %v2062
    %v2591 = vpack.c.b16 %v2079, %v2071
    %v2592 = vpack.c.b16 %v2080, %v2072
    %v2593 = vpack.c.b16 %v2081, %v2073
    %v2594 = vpack.c.b16 %v2082, %v2074
    %v2595 = vpack.c.b16 %v2083, %v2075
    %v2596 = vpack.c.b16 %v2084, %v2076
    %v2597 = vpack.c.b16 %v2085, %v2077
    %v2598 = vpack.c.b16 %v2086, %v2078
    %v2599 = vpack.c.b16 %v2095, %v2087
    %v2600 = vpack.c.b16 %v2096, %v2088
    %v2601 = vpack.c.b16 %v2097, %v2089
    %v2602 = vpack.c.b16 %v2098, %v2090
    %v2603 = vpack.c.b16 %v2099, %v2091
    %v2604 = vpack.c.b16 %v2100, %v2092
    %v2605 = vpack.c.b16 %v2101, %v2093
    %v2606 = vpack.c.b16 %v2102, %v2094
    %v2607 = vpack.c.b16 %v2103, %v2103
    %v2608 = vpack.c.b16 %v2104, %v2104
    %v2609 = vpack.c.b16 %v2105, %v2105
    %v2610 = vpack.c.b16 %v2106, %v2106
    %v2611 = vpack.c.b16 %v2107, %v2107
    %v2612 = vpack.c.b16 %v2108, %v2108
    %v2613 = vpack.c.b16 %v2109, %v2109
    %v2614 = vpack.c.b16 %v2110, %v2110
    %vm3111 = vcmask 850944
    %v3113 = vsel %vm3111, %v68, 0
    %vm3115 = vcmask 1043456
    %v3117 = vsel %vm3115, %v2607, 0
    %v3120 = vsel %vm3115, %v2608, 0
    %v3123 = vsel %vm3115, %v2609, 0
    %v3126 = vsel %vm3115, %v2610, 0
    %v3129 = vsel %vm3115, %v2611, 0
    %v3132 = vsel %vm3115, %v2612, 0
    %v3135 = vsel %vm3115, %v2613, 0
    %v3138 = vsel %vm3115, %v2614, 0
    %3140 = vmatprep.subr.bf16.mxu0 %v2112
    %3141 = vmatpush1.bf16.msra.mxu0 %v2111
    %3142 = vmatprep.subr.bf16.mxu0 %v2120
    %3143 = vmatpush1.bf16.msra.mxu0 %v2119
    %3144 = vmatprep.subr.bf16.mxu0 %v2128
    %3145 = vmatpush1.bf16.msra.mxu0 %v2127
    %3146 = vmatprep.subr.bf16.mxu0 %v2136
    %3147 = vmatpush1.bf16.msra.mxu0 %v2135
    %3148 = vmatprep.subr.bf16.mxu0 %v2144
    %3149 = vmatpush1.bf16.msra.mxu0 %v2143
    %3150 = vmatprep.subr.bf16.mxu0 %v2152
    %3151 = vmatpush1.bf16.msra.mxu0 %v2151
    %3152 = vmatprep.subr.bf16.mxu0 %v2160
    %3153 = vmatpush1.bf16.msra.mxu0 %v2159
    %3154 = vmatprep.subr.bf16.mxu0 %v2168
    %3155 = vmatpush1.bf16.msra.mxu0 %v2167
    %3156 = vmatprep.subr.bf16.mxu0 %v2176
    %3157 = vmatpush1.bf16.msra.mxu0 %v2175
    %3158 = vmatprep.subr.bf16.mxu0 %v2184
    %3159 = vmatpush1.bf16.msra.mxu0 %v2183
    %3160 = vmatprep.subr.bf16.mxu0 %v2192
    %3161 = vmatpush1.bf16.msra.mxu0 %v2191
    %3162 = vmatprep.subr.bf16.mxu0 %v2200
    %3163 = vmatpush1.bf16.msra.mxu0 %v2199
    %3164 = vmatprep.subr.bf16.mxu0 %v2208
    %3165 = vmatpush1.bf16.msra.mxu0 %v2207
    %3166 = vmatprep.subr.bf16.mxu0 %v2216
    %3167 = vmatpush1.bf16.msra.mxu0 %v2215
    %3168 = vmatprep.subr.bf16.mxu0 %v2224
    %3169 = vmatpush1.bf16.msra.mxu0 %v2223
    %3170 = vmatprep.subr.bf16.mxu0 %v2232
    %3171 = vmatpush1.bf16.msra.mxu0 %v2231
    %3172 = vmatprep.mubr.bf16.mxu0 %v62
    %3173 = vmatmul.mubr.bf16.gmra.mrb[0].mxu0 %v61
    %v3174 = vpop.f32.mrb[0].mxu0
    %v3175 = vadd.f32 %v574, %v3174
    %v3176 = vpop.f32.mrb[0].mxu0
    %v3177 = vadd.f32 %v578, %v3176
    %v3178 = vpop.f32.mrb[0].mxu0
    %v3179 = vpop.f32.mrb[0].mxu0
    %3180 = vdwg.mxu0
    %3181 = vmatprep.subr.bf16.mxu0 %v2240
    %3182 = vmatpush1.bf16.msra.mxu0 %v2239
    %3183 = vmatprep.subr.bf16.mxu0 %v2248
    %3184 = vmatpush1.bf16.msra.mxu0 %v2247
    %3185 = vmatprep.subr.bf16.mxu0 %v2256
    %3186 = vmatpush1.bf16.msra.mxu0 %v2255
    %3187 = vmatprep.subr.bf16.mxu0 %v2264
    %3188 = vmatpush1.bf16.msra.mxu0 %v2263
    %3189 = vmatprep.subr.bf16.mxu0 %v2272
    %3190 = vmatpush1.bf16.msra.mxu0 %v2271
    %3191 = vmatprep.subr.bf16.mxu0 %v2280
    %3192 = vmatpush1.bf16.msra.mxu0 %v2279
    %3193 = vmatprep.subr.bf16.mxu0 %v2288
    %3194 = vmatpush1.bf16.msra.mxu0 %v2287
    %3195 = vmatprep.subr.bf16.mxu0 %v2296
    %3196 = vmatpush1.bf16.msra.mxu0 %v2295
    %3197 = vmatprep.subr.bf16.mxu0 %v2304
    %3198 = vmatpush1.bf16.msra.mxu0 %v2303
    %3199 = vmatprep.subr.bf16.mxu0 %v2312
    %3200 = vmatpush1.bf16.msra.mxu0 %v2311
    %3201 = vmatprep.subr.bf16.mxu0 %v2320
    %3202 = vmatpush1.bf16.msra.mxu0 %v2319
    %3203 = vmatprep.subr.bf16.mxu0 %v2328
    %3204 = vmatpush1.bf16.msra.mxu0 %v2327
    %3205 = vmatprep.subr.bf16.mxu0 %v2336
    %3206 = vmatpush1.bf16.msra.mxu0 %v2335
    %3207 = vmatprep.subr.bf16.mxu0 %v2344
    %3208 = vmatpush1.bf16.msra.mxu0 %v2343
    %3209 = vmatprep.subr.bf16.mxu0 %v2352
    %3210 = vmatpush1.bf16.msra.mxu0 %v2351
    %3211 = vmatprep.subr.bf16.mxu0 %v2360
    %3212 = vmatpush1.bf16.msra.mxu0 %v2359
    %3213 = vmatprep.mubr.bf16.mxu0 %v64
    %3214 = vmatmul.mubr.bf16.gmra.mrb[0].mxu0 %v63
    %v3215 = vpop.f32.mrb[0].mxu0
    %v3216 = vadd.f32 %v3175, %v3215
    %v3217 = vpop.f32.mrb[0].mxu0
    %v3218 = vadd.f32 %v3177, %v3217
    %v3219 = vpop.f32.mrb[0].mxu0
    %v3220 = vpop.f32.mrb[0].mxu0
    %3221 = vdwg.mxu0
    %3222 = vmatprep.subr.bf16.mxu0 %v2368
    %3223 = vmatpush1.bf16.msra.mxu0 %v2367
    %3224 = vmatprep.subr.bf16.mxu0 %v2376
    %3225 = vmatpush1.bf16.msra.mxu0 %v2375
    %3226 = vmatprep.subr.bf16.mxu0 %v2384
    %3227 = vmatpush1.bf16.msra.mxu0 %v2383
    %3228 = vmatprep.subr.bf16.mxu0 %v2392
    %3229 = vmatpush1.bf16.msra.mxu0 %v2391
    %3230 = vmatprep.subr.bf16.mxu0 %v2400
    %3231 = vmatpush1.bf16.msra.mxu0 %v2399
    %3232 = vmatprep.subr.bf16.mxu0 %v2408
    %3233 = vmatpush1.bf16.msra.mxu0 %v2407
    %3234 = vmatprep.subr.bf16.mxu0 %v2416
    %3235 = vmatpush1.bf16.msra.mxu0 %v2415
    %3236 = vmatprep.subr.bf16.mxu0 %v2424
    %3237 = vmatpush1.bf16.msra.mxu0 %v2423
    %3238 = vmatprep.subr.bf16.mxu0 %v2432
    %3239 = vmatpush1.bf16.msra.mxu0 %v2431
    %3240 = vmatprep.subr.bf16.mxu0 %v2440
    %3241 = vmatpush1.bf16.msra.mxu0 %v2439
    %3242 = vmatprep.subr.bf16.mxu0 %v2448
    %3243 = vmatpush1.bf16.msra.mxu0 %v2447
    %3244 = vmatprep.subr.bf16.mxu0 %v2456
    %3245 = vmatpush1.bf16.msra.mxu0 %v2455
    %3246 = vmatprep.subr.bf16.mxu0 %v2464
    %3247 = vmatpush1.bf16.msra.mxu0 %v2463
    %3248 = vmatprep.subr.bf16.mxu0 %v2472
    %3249 = vmatpush1.bf16.msra.mxu0 %v2471
    %3250 = vmatprep.subr.bf16.mxu0 %v2480
    %3251 = vmatpush1.bf16.msra.mxu0 %v2479
    %3252 = vmatprep.subr.bf16.mxu0 %v2488
    %3253 = vmatpush1.bf16.msra.mxu0 %v2487
    %3254 = vmatprep.mubr.bf16.mxu0 %v66
    %3255 = vmatmul.mubr.bf16.gmra.mrb[0].mxu0 %v65
    %v3256 = vpop.f32.mrb[0].mxu0
    %v3257 = vadd.f32 %v3216, %v3256
    %v3258 = vpop.f32.mrb[0].mxu0
    %v3259 = vadd.f32 %v3218, %v3258
    %v3260 = vpop.f32.mrb[0].mxu0
    %v3261 = vpop.f32.mrb[0].mxu0
    %3262 = vdwg.mxu0
    %3263 = vmatprep.subr.bf16.mxu0 %v2496
    %3264 = vmatpush1.bf16.msra.mxu0 %v2495
    %3265 = vmatprep.subr.bf16.mxu0 %v2504
    %3266 = vmatpush1.bf16.msra.mxu0 %v2503
    %3267 = vmatprep.subr.bf16.mxu0 %v2512
    %3268 = vmatpush1.bf16.msra.mxu0 %v2511
    %3269 = vmatprep.subr.bf16.mxu0 %v2520
    %3270 = vmatpush1.bf16.msra.mxu0 %v2519
    %3271 = vmatprep.subr.bf16.mxu0 %v2528
    %3272 = vmatpush1.bf16.msra.mxu0 %v2527
    %3273 = vmatprep.subr.bf16.mxu0 %v2536
    %3274 = vmatpush1.bf16.msra.mxu0 %v2535
    %3275 = vmatprep.subr.bf16.mxu0 %v2544
    %3276 = vmatpush1.bf16.msra.mxu0 %v2543
    %3277 = vmatprep.subr.bf16.mxu0 %v2552
    %3278 = vmatpush1.bf16.msra.mxu0 %v2551
    %3279 = vmatprep.subr.bf16.mxu0 %v2560
    %3280 = vmatpush1.bf16.msra.mxu0 %v2559
    %3281 = vmatprep.subr.bf16.mxu0 %v2568
    %3282 = vmatpush1.bf16.msra.mxu0 %v2567
    %3283 = vmatprep.subr.bf16.mxu0 %v2576
    %3284 = vmatpush1.bf16.msra.mxu0 %v2575
    %3285 = vmatprep.subr.bf16.mxu0 %v2584
    %3286 = vmatpush1.bf16.msra.mxu0 %v2583
    %3287 = vmatprep.subr.bf16.mxu0 %v2592
    %3288 = vmatpush1.bf16.msra.mxu0 %v2591
    %3289 = vmatprep.subr.bf16.mxu0 %v2600
    %3290 = vmatpush1.bf16.msra.mxu0 %v2599
    %3291 = vmatprep.subr.bf16.mxu0 %v3120
    %3292 = vmatpush1.bf16.msra.mxu0 %v3117
    %3293 = vmatprep.subr.bf16.mxu0 0
    %3294 = vmatpush1.bf16.msra.mxu0 0
    %3295 = vmatprep.mubr.bf16.mxu0 %v3113
    %3296 = vmatmul.mubr.bf16.gmra.mrb[0].mxu0 %v67
    %v3297 = vpop.f32.mrb[0].mxu0
    %v3298 = vadd.f32 %v3257, %v3297
    %v3299 = vpop.f32.mrb[0].mxu0
    %v3300 = vadd.f32 %v3259, %v3299
    %v3301 = vpop.f32.mrb[0].mxu0
    %v3302 = vpop.f32.mrb[0].mxu0
    %3303 = vdwg.mxu0
    %3304 = vmatprep.subr.bf16.mxu0 %v2114
    %3305 = vmatpush1.bf16.msra.mxu0 %v2113
    %3306 = vmatprep.subr.bf16.mxu0 %v2122
    %3307 = vmatpush1.bf16.msra.mxu0 %v2121
    %3308 = vmatprep.subr.bf16.mxu0 %v2130
    %3309 = vmatpush1.bf16.msra.mxu0 %v2129
    %3310 = vmatprep.subr.bf16.mxu0 %v2138
    %3311 = vmatpush1.bf16.msra.mxu0 %v2137
    %3312 = vmatprep.subr.bf16.mxu0 %v2146
    %3313 = vmatpush1.bf16.msra.mxu0 %v2145
    %3314 = vmatprep.subr.bf16.mxu0 %v2154
    %3315 = vmatpush1.bf16.msra.mxu0 %v2153
    %3316 = vmatprep.subr.bf16.mxu0 %v2162
    %3317 = vmatpush1.bf16.msra.mxu0 %v2161
    %3318 = vmatprep.subr.bf16.mxu0 %v2170
    %3319 = vmatpush1.bf16.msra.mxu0 %v2169
    %3320 = vmatprep.subr.bf16.mxu0 %v2178
    %3321 = vmatpush1.bf16.msra.mxu0 %v2177
    %3322 = vmatprep.subr.bf16.mxu0 %v2186
    %3323 = vmatpush1.bf16.msra.mxu0 %v2185
    %3324 = vmatprep.subr.bf16.mxu0 %v2194
    %3325 = vmatpush1.bf16.msra.mxu0 %v2193
    %3326 = vmatprep.subr.bf16.mxu0 %v2202
    %3327 = vmatpush1.bf16.msra.mxu0 %v2201
    %3328 = vmatprep.subr.bf16.mxu0 %v2210
    %3329 = vmatpush1.bf16.msra.mxu0 %v2209
    %3330 = vmatprep.subr.bf16.mxu0 %v2218
    %3331 = vmatpush1.bf16.msra.mxu0 %v2217
    %3332 = vmatprep.subr.bf16.mxu0 %v2226
    %3333 = vmatpush1.bf16.msra.mxu0 %v2225
    %3334 = vmatprep.subr.bf16.mxu0 %v2234
    %3335 = vmatpush1.bf16.msra.mxu0 %v2233
    %3336 = vmatprep.mubr.bf16.mxu0 %v62
    %3337 = vmatmul.mubr.bf16.gmra.mrb[0].mxu0 %v61
    %v3338 = vpop.f32.mrb[0].mxu0
    %v3339 = vadd.f32 %v582, %v3338
    %v3340 = vpop.f32.mrb[0].mxu0
    %v3341 = vadd.f32 %v586, %v3340
    %v3342 = vpop.f32.mrb[0].mxu0
    %v3343 = vpop.f32.mrb[0].mxu0
    %3344 = vdwg.mxu0
    %3345 = vmatprep.subr.bf16.mxu0 %v2242
    %3346 = vmatpush1.bf16.msra.mxu0 %v2241
    %3347 = vmatprep.subr.bf16.mxu0 %v2250
    %3348 = vmatpush1.bf16.msra.mxu0 %v2249
    %3349 = vmatprep.subr.bf16.mxu0 %v2258
    %3350 = vmatpush1.bf16.msra.mxu0 %v2257
    %3351 = vmatprep.subr.bf16.mxu0 %v2266
    %3352 = vmatpush1.bf16.msra.mxu0 %v2265
    %3353 = vmatprep.subr.bf16.mxu0 %v2274
    %3354 = vmatpush1.bf16.msra.mxu0 %v2273
    %3355 = vmatprep.subr.bf16.mxu0 %v2282
    %3356 = vmatpush1.bf16.msra.mxu0 %v2281
    %3357 = vmatprep.subr.bf16.mxu0 %v2290
    %3358 = vmatpush1.bf16.msra.mxu0 %v2289
    %3359 = vmatprep.subr.bf16.mxu0 %v2298
    %3360 = vmatpush1.bf16.msra.mxu0 %v2297
    %3361 = vmatprep.subr.bf16.mxu0 %v2306
    %3362 = vmatpush1.bf16.msra.mxu0 %v2305
    %3363 = vmatprep.subr.bf16.mxu0 %v2314
    %3364 = vmatpush1.bf16.msra.mxu0 %v2313
    %3365 = vmatprep.subr.bf16.mxu0 %v2322
    %3366 = vmatpush1.bf16.msra.mxu0 %v2321
    %3367 = vmatprep.subr.bf16.mxu0 %v2330
    %3368 = vmatpush1.bf16.msra.mxu0 %v2329
    %3369 = vmatprep.subr.bf16.mxu0 %v2338
    %3370 = vmatpush1.bf16.msra.mxu0 %v2337
    %3371 = vmatprep.subr.bf16.mxu0 %v2346
    %3372 = vmatpush1.bf16.msra.mxu0 %v2345
    %3373 = vmatprep.subr.bf16.mxu0 %v2354
    %3374 = vmatpush1.bf16.msra.mxu0 %v2353
    %3375 = vmatprep.subr.bf16.mxu0 %v2362
    %3376 = vmatpush1.bf16.msra.mxu0 %v2361
    %3377 = vmatprep.mubr.bf16.mxu0 %v64
    %3378 = vmatmul.mubr.bf16.gmra.mrb[0].mxu0 %v63
    %v3379 = vpop.f32.mrb[0].mxu0
    %v3380 = vadd.f32 %v3339, %v3379
    %v3381 = vpop.f32.mrb[0].mxu0
    %v3382 = vadd.f32 %v3341, %v3381
    %v3383 = vpop.f32.mrb[0].mxu0
    %v3384 = vpop.f32.mrb[0].mxu0
    %3385 = vdwg.mxu0
    %3386 = vmatprep.subr.bf16.mxu0 %v2370
    %3387 = vmatpush1.bf16.msra.mxu0 %v2369
    %3388 = vmatprep.subr.bf16.mxu0 %v2378
    %3389 = vmatpush1.bf16.msra.mxu0 %v2377
    %3390 = vmatprep.subr.bf16.mxu0 %v2386
    %3391 = vmatpush1.bf16.msra.mxu0 %v2385
    %3392 = vmatprep.subr.bf16.mxu0 %v2394
    %3393 = vmatpush1.bf16.msra.mxu0 %v2393
    %3394 = vmatprep.subr.bf16.mxu0 %v2402
    %3395 = vmatpush1.bf16.msra.mxu0 %v2401
    %3396 = vmatprep.subr.bf16.mxu0 %v2410
    %3397 = vmatpush1.bf16.msra.mxu0 %v2409
    %3398 = vmatprep.subr.bf16.mxu0 %v2418
    %3399 = vmatpush1.bf16.msra.mxu0 %v2417
    %3400 = vmatprep.subr.bf16.mxu0 %v2426
    %3401 = vmatpush1.bf16.msra.mxu0 %v2425
    %3402 = vmatprep.subr.bf16.mxu0 %v2434
    %3403 = vmatpush1.bf16.msra.mxu0 %v2433
    %3404 = vmatprep.subr.bf16.mxu0 %v2442
    %3405 = vmatpush1.bf16.msra.mxu0 %v2441
    %3406 = vmatprep.subr.bf16.mxu0 %v2450
    %3407 = vmatpush1.bf16.msra.mxu0 %v2449
    %3408 = vmatprep.subr.bf16.mxu0 %v2458
    %3409 = vmatpush1.bf16.msra.mxu0 %v2457
    %3410 = vmatprep.subr.bf16.mxu0 %v2466
    %3411 = vmatpush1.bf16.msra.mxu0 %v2465
    %3412 = vmatprep.subr.bf16.mxu0 %v2474
    %3413 = vmatpush1.bf16.msra.mxu0 %v2473
    %3414 = vmatprep.subr.bf16.mxu0 %v2482
    %3415 = vmatpush1.bf16.msra.mxu0 %v2481
    %3416 = vmatprep.subr.bf16.mxu0 %v2490
    %3417 = vmatpush1.bf16.msra.mxu0 %v2489
    %3418 = vmatprep.mubr.bf16.mxu0 %v66
    %3419 = vmatmul.mubr.bf16.gmra.mrb[0].mxu0 %v65
    %v3420 = vpop.f32.mrb[0].mxu0
    %v3421 = vadd.f32 %v3380, %v3420
    %v3422 = vpop.f32.mrb[0].mxu0
    %v3423 = vadd.f32 %v3382, %v3422
    %v3424 = vpop.f32.mrb[0].mxu0
    %v3425 = vpop.f32.mrb[0].mxu0
    %3426 = vdwg.mxu0
    %3427 = vmatprep.subr.bf16.mxu0 %v2498
    %3428 = vmatpush1.bf16.msra.mxu0 %v2497
    %3429 = vmatprep.subr.bf16.mxu0 %v2506
    %3430 = vmatpush1.bf16.msra.mxu0 %v2505
    %3431 = vmatprep.subr.bf16.mxu0 %v2514
    %3432 = vmatpush1.bf16.msra.mxu0 %v2513
    %3433 = vmatprep.subr.bf16.mxu0 %v2522
    %3434 = vmatpush1.bf16.msra.mxu0 %v2521
    %3435 = vmatprep.subr.bf16.mxu0 %v2530
    %3436 = vmatpush1.bf16.msra.mxu0 %v2529
    %3437 = vmatprep.subr.bf16.mxu0 %v2538
    %3438 = vmatpush1.bf16.msra.mxu0 %v2537
    %3439 = vmatprep.subr.bf16.mxu0 %v2546
    %3440 = vmatpush1.bf16.msra.mxu0 %v2545
    %3441 = vmatprep.subr.bf16.mxu0 %v2554
    %3442 = vmatpush1.bf16.msra.mxu0 %v2553
    %3443 = vmatprep.subr.bf16.mxu0 %v2562
    %3444 = vmatpush1.bf16.msra.mxu0 %v2561
    %3445 = vmatprep.subr.bf16.mxu0 %v2570
    %3446 = vmatpush1.bf16.msra.mxu0 %v2569
    %3447 = vmatprep.subr.bf16.mxu0 %v2578
    %3448 = vmatpush1.bf16.msra.mxu0 %v2577
    %3449 = vmatprep.subr.bf16.mxu0 %v2586
    %3450 = vmatpush1.bf16.msra.mxu0 %v2585
    %3451 = vmatprep.subr.bf16.mxu0 %v2594
    %3452 = vmatpush1.bf16.msra.mxu0 %v2593
    %3453 = vmatprep.subr.bf16.mxu0 %v2602
    %3454 = vmatpush1.bf16.msra.mxu0 %v2601
    %3455 = vmatprep.subr.bf16.mxu0 %v3126
    %3456 = vmatpush1.bf16.msra.mxu0 %v3123
    %3457 = vmatprep.subr.bf16.mxu0 0
    %3458 = vmatpush1.bf16.msra.mxu0 0
    %3459 = vmatprep.mubr.bf16.mxu0 %v3113
    %3460 = vmatmul.mubr.bf16.gmra.mrb[0].mxu0 %v67
    %v3461 = vpop.f32.mrb[0].mxu0
    %v3462 = vadd.f32 %v3421, %v3461
    %v3463 = vpop.f32.mrb[0].mxu0
    %v3464 = vadd.f32 %v3423, %v3463
    %v3465 = vpop.f32.mrb[0].mxu0
    %v3466 = vpop.f32.mrb[0].mxu0
    %3467 = vdwg.mxu0
    %3468 = vmatprep.subr.bf16.mxu0 %v2116
    %3469 = vmatpush1.bf16.msra.mxu0 %v2115
    %3470 = vmatprep.subr.bf16.mxu0 %v2124
    %3471 = vmatpush1.bf16.msra.mxu0 %v2123
    %3472 = vmatprep.subr.bf16.mxu0 %v2132
    %3473 = vmatpush1.bf16.msra.mxu0 %v2131
    %3474 = vmatprep.subr.bf16.mxu0 %v2140
    %3475 = vmatpush1.bf16.msra.mxu0 %v2139
    %3476 = vmatprep.subr.bf16.mxu0 %v2148
    %3477 = vmatpush1.bf16.msra.mxu0 %v2147
    %3478 = vmatprep.subr.bf16.mxu0 %v2156
    %3479 = vmatpush1.bf16.msra.mxu0 %v2155
    %3480 = vmatprep.subr.bf16.mxu0 %v2164
    %3481 = vmatpush1.bf16.msra.mxu0 %v2163
    %3482 = vmatprep.subr.bf16.mxu0 %v2172
    %3483 = vmatpush1.bf16.msra.mxu0 %v2171
    %3484 = vmatprep.subr.bf16.mxu0 %v2180
    %3485 = vmatpush1.bf16.msra.mxu0 %v2179
    %3486 = vmatprep.subr.bf16.mxu0 %v2188
    %3487 = vmatpush1.bf16.msra.mxu0 %v2187
    %3488 = vmatprep.subr.bf16.mxu0 %v2196
    %3489 = vmatpush1.bf16.msra.mxu0 %v2195
    %3490 = vmatprep.subr.bf16.mxu0 %v2204
    %3491 = vmatpush1.bf16.msra.mxu0 %v2203
    %3492 = vmatprep.subr.bf16.mxu0 %v2212
    %3493 = vmatpush1.bf16.msra.mxu0 %v2211
    %3494 = vmatprep.subr.bf16.mxu0 %v2220
    %3495 = vmatpush1.bf16.msra.mxu0 %v2219
    %3496 = vmatprep.subr.bf16.mxu0 %v2228
    %3497 = vmatpush1.bf16.msra.mxu0 %v2227
    %3498 = vmatprep.subr.bf16.mxu0 %v2236
    %3499 = vmatpush1.bf16.msra.mxu0 %v2235
    %3500 = vmatprep.mubr.bf16.mxu0 %v62
    %3501 = vmatmul.mubr.bf16.gmra.mrb[0].mxu0 %v61
    %v3502 = vpop.f32.mrb[0].mxu0
    %v3503 = vadd.f32 %v590, %v3502
    %v3504 = vpop.f32.mrb[0].mxu0
    %v3505 = vadd.f32 %v594, %v3504
    %v3506 = vpop.f32.mrb[0].mxu0
    %v3507 = vpop.f32.mrb[0].mxu0
    %3508 = vdwg.mxu0
    %3509 = vmatprep.subr.bf16.mxu0 %v2244
    %3510 = vmatpush1.bf16.msra.mxu0 %v2243
    %3511 = vmatprep.subr.bf16.mxu0 %v2252
    %3512 = vmatpush1.bf16.msra.mxu0 %v2251
    %3513 = vmatprep.subr.bf16.mxu0 %v2260
    %3514 = vmatpush1.bf16.msra.mxu0 %v2259
    %3515 = vmatprep.subr.bf16.mxu0 %v2268
    %3516 = vmatpush1.bf16.msra.mxu0 %v2267
    %3517 = vmatprep.subr.bf16.mxu0 %v2276
    %3518 = vmatpush1.bf16.msra.mxu0 %v2275
    %3519 = vmatprep.subr.bf16.mxu0 %v2284
    %3520 = vmatpush1.bf16.msra.mxu0 %v2283
    %3521 = vmatprep.subr.bf16.mxu0 %v2292
    %3522 = vmatpush1.bf16.msra.mxu0 %v2291
    %3523 = vmatprep.subr.bf16.mxu0 %v2300
    %3524 = vmatpush1.bf16.msra.mxu0 %v2299
    %3525 = vmatprep.subr.bf16.mxu0 %v2308
    %3526 = vmatpush1.bf16.msra.mxu0 %v2307
    %3527 = vmatprep.subr.bf16.mxu0 %v2316
    %3528 = vmatpush1.bf16.msra.mxu0 %v2315
    %3529 = vmatprep.subr.bf16.mxu0 %v2324
    %3530 = vmatpush1.bf16.msra.mxu0 %v2323
    %3531 = vmatprep.subr.bf16.mxu0 %v2332
    %3532 = vmatpush1.bf16.msra.mxu0 %v2331
    %3533 = vmatprep.subr.bf16.mxu0 %v2340
    %3534 = vmatpush1.bf16.msra.mxu0 %v2339
    %3535 = vmatprep.subr.bf16.mxu0 %v2348
    %3536 = vmatpush1.bf16.msra.mxu0 %v2347
    %3537 = vmatprep.subr.bf16.mxu0 %v2356
    %3538 = vmatpush1.bf16.msra.mxu0 %v2355
    %3539 = vmatprep.subr.bf16.mxu0 %v2364
    %3540 = vmatpush1.bf16.msra.mxu0 %v2363
    %3541 = vmatprep.mubr.bf16.mxu0 %v64
    %3542 = vmatmul.mubr.bf16.gmra.mrb[0].mxu0 %v63
    %v3543 = vpop.f32.mrb[0].mxu0
    %v3544 = vadd.f32 %v3503, %v3543
    %v3545 = vpop.f32.mrb[0].mxu0
    %v3546 = vadd.f32 %v3505, %v3545
    %v3547 = vpop.f32.mrb[0].mxu0
    %v3548 = vpop.f32.mrb[0].mxu0
    %3549 = vdwg.mxu0
    %3550 = vmatprep.subr.bf16.mxu0 %v2372
    %3551 = vmatpush1.bf16.msra.mxu0 %v2371
    %3552 = vmatprep.subr.bf16.mxu0 %v2380
    %3553 = vmatpush1.bf16.msra.mxu0 %v2379
    %3554 = vmatprep.subr.bf16.mxu0 %v2388
    %3555 = vmatpush1.bf16.msra.mxu0 %v2387
    %3556 = vmatprep.subr.bf16.mxu0 %v2396
    %3557 = vmatpush1.bf16.msra.mxu0 %v2395
    %3558 = vmatprep.subr.bf16.mxu0 %v2404
    %3559 = vmatpush1.bf16.msra.mxu0 %v2403
    %3560 = vmatprep.subr.bf16.mxu0 %v2412
    %3561 = vmatpush1.bf16.msra.mxu0 %v2411
    %3562 = vmatprep.subr.bf16.mxu0 %v2420
    %3563 = vmatpush1.bf16.msra.mxu0 %v2419
    %3564 = vmatprep.subr.bf16.mxu0 %v2428
    %3565 = vmatpush1.bf16.msra.mxu0 %v2427
    %3566 = vmatprep.subr.bf16.mxu0 %v2436
    %3567 = vmatpush1.bf16.msra.mxu0 %v2435
    %3568 = vmatprep.subr.bf16.mxu0 %v2444
    %3569 = vmatpush1.bf16.msra.mxu0 %v2443
    %3570 = vmatprep.subr.bf16.mxu0 %v2452
    %3571 = vmatpush1.bf16.msra.mxu0 %v2451
    %3572 = vmatprep.subr.bf16.mxu0 %v2460
    %3573 = vmatpush1.bf16.msra.mxu0 %v2459
    %3574 = vmatprep.subr.bf16.mxu0 %v2468
    %3575 = vmatpush1.bf16.msra.mxu0 %v2467
    %3576 = vmatprep.subr.bf16.mxu0 %v2476
    %3577 = vmatpush1.bf16.msra.mxu0 %v2475
    %3578 = vmatprep.subr.bf16.mxu0 %v2484
    %3579 = vmatpush1.bf16.msra.mxu0 %v2483
    %3580 = vmatprep.subr.bf16.mxu0 %v2492
    %3581 = vmatpush1.bf16.msra.mxu0 %v2491
    %3582 = vmatprep.mubr.bf16.mxu0 %v66
    %3583 = vmatmul.mubr.bf16.gmra.mrb[0].mxu0 %v65
    %v3584 = vpop.f32.mrb[0].mxu0
    %v3585 = vadd.f32 %v3544, %v3584
    %v3586 = vpop.f32.mrb[0].mxu0
    %v3587 = vadd.f32 %v3546, %v3586
    %v3588 = vpop.f32.mrb[0].mxu0
    %v3589 = vpop.f32.mrb[0].mxu0
    %3590 = vdwg.mxu0
    %3591 = vmatprep.subr.bf16.mxu0 %v2500
    %3592 = vmatpush1.bf16.msra.mxu0 %v2499
    %3593 = vmatprep.subr.bf16.mxu0 %v2508
    %3594 = vmatpush1.bf16.msra.mxu0 %v2507
    %3595 = vmatprep.subr.bf16.mxu0 %v2516
    %3596 = vmatpush1.bf16.msra.mxu0 %v2515
    %3597 = vmatprep.subr.bf16.mxu0 %v2524
    %3598 = vmatpush1.bf16.msra.mxu0 %v2523
    %3599 = vmatprep.subr.bf16.mxu0 %v2532
    %3600 = vmatpush1.bf16.msra.mxu0 %v2531
    %3601 = vmatprep.subr.bf16.mxu0 %v2540
    %3602 = vmatpush1.bf16.msra.mxu0 %v2539
    %3603 = vmatprep.subr.bf16.mxu0 %v2548
    %3604 = vmatpush1.bf16.msra.mxu0 %v2547
    %3605 = vmatprep.subr.bf16.mxu0 %v2556
    %3606 = vmatpush1.bf16.msra.mxu0 %v2555
    %3607 = vmatprep.subr.bf16.mxu0 %v2564
    %3608 = vmatpush1.bf16.msra.mxu0 %v2563
    %3609 = vmatprep.subr.bf16.mxu0 %v2572
    %3610 = vmatpush1.bf16.msra.mxu0 %v2571
    %3611 = vmatprep.subr.bf16.mxu0 %v2580
    %3612 = vmatpush1.bf16.msra.mxu0 %v2579
    %3613 = vmatprep.subr.bf16.mxu0 %v2588
    %3614 = vmatpush1.bf16.msra.mxu0 %v2587
    %3615 = vmatprep.subr.bf16.mxu0 %v2596
    %3616 = vmatpush1.bf16.msra.mxu0 %v2595
    %3617 = vmatprep.subr.bf16.mxu0 %v2604
    %3618 = vmatpush1.bf16.msra.mxu0 %v2603
    %3619 = vmatprep.subr.bf16.mxu0 %v3132
    %3620 = vmatpush1.bf16.msra.mxu0 %v3129
    %3621 = vmatprep.subr.bf16.mxu0 0
    %3622 = vmatpush1.bf16.msra.mxu0 0
    %3623 = vmatprep.mubr.bf16.mxu0 %v3113
    %3624 = vmatmul.mubr.bf16.gmra.mrb[0].mxu0 %v67
    %v3625 = vpop.f32.mrb[0].mxu0
    %v3626 = vadd.f32 %v3585, %v3625
    %v3627 = vpop.f32.mrb[0].mxu0
    %v3628 = vadd.f32 %v3587, %v3627
    %v3629 = vpop.f32.mrb[0].mxu0
    %v3630 = vpop.f32.mrb[0].mxu0
    %3631 = vdwg.mxu0
    %3632 = vmatprep.subr.bf16.mxu0 %v2118
    %3633 = vmatpush1.bf16.msra.mxu0 %v2117
    %3634 = vmatprep.subr.bf16.mxu0 %v2126
    %3635 = vmatpush1.bf16.msra.mxu0 %v2125
    %3636 = vmatprep.subr.bf16.mxu0 %v2134
    %3637 = vmatpush1.bf16.msra.mxu0 %v2133
    %3638 = vmatprep.subr.bf16.mxu0 %v2142
    %3639 = vmatpush1.bf16.msra.mxu0 %v2141
    %3640 = vmatprep.subr.bf16.mxu0 %v2150
    %3641 = vmatpush1.bf16.msra.mxu0 %v2149
    %3642 = vmatprep.subr.bf16.mxu0 %v2158
    %3643 = vmatpush1.bf16.msra.mxu0 %v2157
    %3644 = vmatprep.subr.bf16.mxu0 %v2166
    %3645 = vmatpush1.bf16.msra.mxu0 %v2165
    %3646 = vmatprep.subr.bf16.mxu0 %v2174
    %3647 = vmatpush1.bf16.msra.mxu0 %v2173
    %3648 = vmatprep.subr.bf16.mxu0 %v2182
    %3649 = vmatpush1.bf16.msra.mxu0 %v2181
    %3650 = vmatprep.subr.bf16.mxu0 %v2190
    %3651 = vmatpush1.bf16.msra.mxu0 %v2189
    %3652 = vmatprep.subr.bf16.mxu0 %v2198
    %3653 = vmatpush1.bf16.msra.mxu0 %v2197
    %3654 = vmatprep.subr.bf16.mxu0 %v2206
    %3655 = vmatpush1.bf16.msra.mxu0 %v2205
    %3656 = vmatprep.subr.bf16.mxu0 %v2214
    %3657 = vmatpush1.bf16.msra.mxu0 %v2213
    %3658 = vmatprep.subr.bf16.mxu0 %v2222
    %3659 = vmatpush1.bf16.msra.mxu0 %v2221
    %3660 = vmatprep.subr.bf16.mxu0 %v2230
    %3661 = vmatpush1.bf16.msra.mxu0 %v2229
    %3662 = vmatprep.subr.bf16.mxu0 %v2238
    %3663 = vmatpush1.bf16.msra.mxu0 %v2237
    %3664 = vmatprep.mubr.bf16.mxu0 %v62
    %3665 = vmatmul.mubr.bf16.gmra.mrb[0].mxu0 %v61
    %v3666 = vpop.f32.mrb[0].mxu0
    %v3667 = vadd.f32 %v598, %v3666
    %v3668 = vpop.f32.mrb[0].mxu0
    %v3669 = vadd.f32 %v602, %v3668
    %v3670 = vpop.f32.mrb[0].mxu0
    %v3671 = vpop.f32.mrb[0].mxu0
    %3672 = vdwg.mxu0
    %3673 = vmatprep.subr.bf16.mxu0 %v2246
    %3674 = vmatpush1.bf16.msra.mxu0 %v2245
    %3675 = vmatprep.subr.bf16.mxu0 %v2254
    %3676 = vmatpush1.bf16.msra.mxu0 %v2253
    %3677 = vmatprep.subr.bf16.mxu0 %v2262
    %3678 = vmatpush1.bf16.msra.mxu0 %v2261
    %3679 = vmatprep.subr.bf16.mxu0 %v2270
    %3680 = vmatpush1.bf16.msra.mxu0 %v2269
    %3681 = vmatprep.subr.bf16.mxu0 %v2278
    %3682 = vmatpush1.bf16.msra.mxu0 %v2277
    %3683 = vmatprep.subr.bf16.mxu0 %v2286
    %3684 = vmatpush1.bf16.msra.mxu0 %v2285
    %3685 = vmatprep.subr.bf16.mxu0 %v2294
    %3686 = vmatpush1.bf16.msra.mxu0 %v2293
    %3687 = vmatprep.subr.bf16.mxu0 %v2302
    %3688 = vmatpush1.bf16.msra.mxu0 %v2301
    %3689 = vmatprep.subr.bf16.mxu0 %v2310
    %3690 = vmatpush1.bf16.msra.mxu0 %v2309
    %3691 = vmatprep.subr.bf16.mxu0 %v2318
    %3692 = vmatpush1.bf16.msra.mxu0 %v2317
    %3693 = vmatprep.subr.bf16.mxu0 %v2326
    %3694 = vmatpush1.bf16.msra.mxu0 %v2325
    %3695 = vmatprep.subr.bf16.mxu0 %v2334
    %3696 = vmatpush1.bf16.msra.mxu0 %v2333
    %3697 = vmatprep.subr.bf16.mxu0 %v2342
    %3698 = vmatpush1.bf16.msra.mxu0 %v2341
    %3699 = vmatprep.subr.bf16.mxu0 %v2350
    %3700 = vmatpush1.bf16.msra.mxu0 %v2349
    %3701 = vmatprep.subr.bf16.mxu0 %v2358
    %3702 = vmatpush1.bf16.msra.mxu0 %v2357
    %3703 = vmatprep.subr.bf16.mxu0 %v2366
    %3704 = vmatpush1.bf16.msra.mxu0 %v2365
    %3705 = vmatprep.mubr.bf16.mxu0 %v64
    %3706 = vmatmul.mubr.bf16.gmra.mrb[0].mxu0 %v63
    %v3707 = vpop.f32.mrb[0].mxu0
    %v3708 = vadd.f32 %v3667, %v3707
    %v3709 = vpop.f32.mrb[0].mxu0
    %v3710 = vadd.f32 %v3669, %v3709
    %v3711 = vpop.f32.mrb[0].mxu0
    %v3712 = vpop.f32.mrb[0].mxu0
    %3713 = vdwg.mxu0
    %3714 = vmatprep.subr.bf16.mxu0 %v2374
    %3715 = vmatpush1.bf16.msra.mxu0 %v2373
    %3716 = vmatprep.subr.bf16.mxu0 %v2382
    %3717 = vmatpush1.bf16.msra.mxu0 %v2381
    %3718 = vmatprep.subr.bf16.mxu0 %v2390
    %3719 = vmatpush1.bf16.msra.mxu0 %v2389
    %3720 = vmatprep.subr.bf16.mxu0 %v2398
    %3721 = vmatpush1.bf16.msra.mxu0 %v2397
    %3722 = vmatprep.subr.bf16.mxu0 %v2406
    %3723 = vmatpush1.bf16.msra.mxu0 %v2405
    %3724 = vmatprep.subr.bf16.mxu0 %v2414
    %3725 = vmatpush1.bf16.msra.mxu0 %v2413
    %3726 = vmatprep.subr.bf16.mxu0 %v2422
    %3727 = vmatpush1.bf16.msra.mxu0 %v2421
    %3728 = vmatprep.subr.bf16.mxu0 %v2430
    %3729 = vmatpush1.bf16.msra.mxu0 %v2429
    %3730 = vmatprep.subr.bf16.mxu0 %v2438
    %3731 = vmatpush1.bf16.msra.mxu0 %v2437
    %3732 = vmatprep.subr.bf16.mxu0 %v2446
    %3733 = vmatpush1.bf16.msra.mxu0 %v2445
    %3734 = vmatprep.subr.bf16.mxu0 %v2454
    %3735 = vmatpush1.bf16.msra.mxu0 %v2453
    %3736 = vmatprep.subr.bf16.mxu0 %v2462
    %3737 = vmatpush1.bf16.msra.mxu0 %v2461
    %3738 = vmatprep.subr.bf16.mxu0 %v2470
    %3739 = vmatpush1.bf16.msra.mxu0 %v2469
    %3740 = vmatprep.subr.bf16.mxu0 %v2478
    %3741 = vmatpush1.bf16.msra.mxu0 %v2477
    %3742 = vmatprep.subr.bf16.mxu0 %v2486
    %3743 = vmatpush1.bf16.msra.mxu0 %v2485
    %3744 = vmatprep.subr.bf16.mxu0 %v2494
    %3745 = vmatpush1.bf16.msra.mxu0 %v2493
    %3746 = vmatprep.mubr.bf16.mxu0 %v66
    %3747 = vmatmul.mubr.bf16.gmra.mrb[0].mxu0 %v65
    %v3748 = vpop.f32.mrb[0].mxu0
    %v3749 = vadd.f32 %v3708, %v3748
    %v3750 = vpop.f32.mrb[0].mxu0
    %v3751 = vadd.f32 %v3710, %v3750
    %v3752 = vpop.f32.mrb[0].mxu0
    %v3753 = vpop.f32.mrb[0].mxu0
    %3754 = vdwg.mxu0
    %3755 = vmatprep.subr.bf16.mxu0 %v2502
    %3756 = vmatpush1.bf16.msra.mxu0 %v2501
    %3757 = vmatprep.subr.bf16.mxu0 %v2510
    %3758 = vmatpush1.bf16.msra.mxu0 %v2509
    %3759 = vmatprep.subr.bf16.mxu0 %v2518
    %3760 = vmatpush1.bf16.msra.mxu0 %v2517
    %3761 = vmatprep.subr.bf16.mxu0 %v2526
    %3762 = vmatpush1.bf16.msra.mxu0 %v2525
    %3763 = vmatprep.subr.bf16.mxu0 %v2534
    %3764 = vmatpush1.bf16.msra.mxu0 %v2533
    %3765 = vmatprep.subr.bf16.mxu0 %v2542
    %3766 = vmatpush1.bf16.msra.mxu0 %v2541
    %3767 = vmatprep.subr.bf16.mxu0 %v2550
    %3768 = vmatpush1.bf16.msra.mxu0 %v2549
    %3769 = vmatprep.subr.bf16.mxu0 %v2558
    %3770 = vmatpush1.bf16.msra.mxu0 %v2557
    %3771 = vmatprep.subr.bf16.mxu0 %v2566
    %3772 = vmatpush1.bf16.msra.mxu0 %v2565
    %3773 = vmatprep.subr.bf16.mxu0 %v2574
    %3774 = vmatpush1.bf16.msra.mxu0 %v2573
    %3775 = vmatprep.subr.bf16.mxu0 %v2582
    %3776 = vmatpush1.bf16.msra.mxu0 %v2581
    %3777 = vmatprep.subr.bf16.mxu0 %v2590
    %3778 = vmatpush1.bf16.msra.mxu0 %v2589
    %3779 = vmatprep.subr.bf16.mxu0 %v2598
    %3780 = vmatpush1.bf16.msra.mxu0 %v2597
    %3781 = vmatprep.subr.bf16.mxu0 %v2606
    %3782 = vmatpush1.bf16.msra.mxu0 %v2605
    %3783 = vmatprep.subr.bf16.mxu0 %v3138
    %3784 = vmatpush1.bf16.msra.mxu0 %v3135
    %3785 = vmatprep.subr.bf16.mxu0 0
    %3786 = vmatpush1.bf16.msra.mxu0 0
    %3787 = vmatprep.mubr.bf16.mxu0 %v3113
    %3788 = vmatmul.mubr.bf16.gmra.mrb[0].mxu0 %v67
    %v3789 = vpop.f32.mrb[0].mxu0
    %v3790 = vadd.f32 %v3749, %v3789
    %v3791 = vpop.f32.mrb[0].mxu0
    %v3792 = vadd.f32 %v3751, %v3791
    %v3793 = vpop.f32.mrb[0].mxu0
    %v3794 = vpop.f32.mrb[0].mxu0
    %3795 = vdwg.mxu0
    %3796 = vst [vmem:[#allocation8] sm:$0xff] %v3298
    %3797 = vst [vmem:[#allocation8 + $0x8] sm:$0xff] %v3300
    %3798 = vst [vmem:[#allocation8 + $0x10] sm:$0xff] %v3462
    %3799 = vst [vmem:[#allocation8 + $0x18] sm:$0xff] %v3464
    %3800 = vst [vmem:[#allocation8 + $0x20] sm:$0xff] %v3626
    %3801 = vst [vmem:[#allocation8 + $0x28] sm:$0xff] %v3628
    %3802 = vst [vmem:[#allocation8 + $0x30] sm:$0xff] %v3790
    %3803 = vst [vmem:[#allocation8 + $0x38] sm:$0xff] %v3792
    // Predicated region
    $region26: #{linear_pallas.1} parent=1 // pred_check
      _
    $region27: #{linear_pallas.1} parent=1 // pred_check_branch
      %3805 = sbr.rel (0) target = $region29
    $region28: #{linear_pallas.1} parent=1 // pred_region
      %s3807 = ssub.s32 1024, 1024
      %3808 = vsyncadd [#allocation4], %s3807
      %s3810 = sshll.u32 [#allocation8], 4
      %s3811 = int_to_ptr.vmem [resolvable:$true] %s3810
      %3813 = dma.vmem_to_hbm [thread:$0]  %s3811, 1024, %s3, [#allocation4]
    $region29: #{linear_pallas.1} parent=1 // pred_fallthru
      _
    // Predicated region
    $region30: #{linear_pallas.1} parent=1 // pred_check
      _
    $region31: #{linear_pallas.1} parent=1 // pred_check_branch
      %3815 = sbr.rel (0) target = $region33
    $region32: #{linear_pallas.1} parent=1 // pred_region
      %3816 = dma.done [#allocation4], 1024
    $region33: #{linear_pallas.1} parent=1 // pred_fallthru
      _
    %3817 = vsyncpa [#allocation3], 1
    %3818 = vsyncpa [#allocation6], 1
    %3819 = vsyncpa [#allocation4], 1

</llo_original>
